<compile_context>
chip_gen: v5e
topology: v5e:2x2
jax: 0.10.0
libtpu: 0.0.40
codegen_flags: <defaults>
</compile_context>

<pallas_src>
import functools
import math

import numpy as np
import jax
import jax.numpy as jnp
from jax.experimental import pallas as pl
from jax.experimental.pallas import tpu as pltpu

ROI_SIZE = (14, 14)
BN_EPS = 1e-5


# ----------------------------------------------------------------------------
# Kernel 1: per-ROI  (interp matmul on padded grid -> im2col -> fused 3x3 conv)
#           + streaming BatchNorm statistics across the ROI grid axis.
# ----------------------------------------------------------------------------
def _roi_conv_kernel(bidx_ref, m_ref, f_ref, w_ref, out_ref, stats_ref, *, oh, ow):
    del bidx_ref  # only consumed by the BlockSpec index_maps
    i = pl.program_id(0)
    c_in = f_ref.shape[-1]

    # 1) roi_align bilinear interpolation onto the replicate-padded
    #    (oh+2, ow+2) output grid, as a single MXU matmul:
    #    [(oh+2)(ow+2), H*W] @ [H*W, C_in]  (bf16 operands, f32 accumulate)
    rk = jnp.dot(m_ref[0], f_ref[0], preferred_element_type=jnp.float32)
    rk3 = rk.reshape(oh + 2, ow + 2, c_in)

    # 2) im2col of the 3x3 taps; replicate padding is already baked into the
    #    padded output grid, so plain static shifted slices suffice.
    taps = [rk3[kh:kh + oh, kw:kw + ow, :] for kh in range(3) for kw in range(3)]
    stacked = jnp.concatenate(taps, axis=-1).reshape(oh * ow, 9 * c_in)

    # 3) fused 3x3 conv: one K = 9*C_in matmul.  Conv bias is omitted: the
    #    train-mode BatchNorm mean subtraction cancels it exactly.
    y = jnp.dot(stacked.astype(jnp.bfloat16), w_ref[...],
                preferred_element_type=jnp.float32)            # [P, C_out] f32
    out_ref[0] = y

    # 4) streaming BatchNorm statistics (per-channel sum / sum of squares),
    #    accumulated in the resident [2, C_out] output block.
    @pl.when(i == 0)
    def _():
        stats_ref[...] = jnp.zeros_like(stats_ref)

    s = jnp.concatenate([jnp.sum(y, axis=0, keepdims=True),
                         jnp.sum(y * y, axis=0, keepdims=True)], axis=0)
    stats_ref[...] += s


# ----------------------------------------------------------------------------
# Kernel 2: apply the (pre-folded) BatchNorm affine:  y * scale + shift
# ----------------------------------------------------------------------------
def _bn_apply_kernel(y_ref, scale_ref, shift_ref, out_ref):
    out_ref[0] = y_ref[0] * scale_ref[...] + shift_ref[...]


# ----------------------------------------------------------------------------
# Host-side glue: bilinear-interpolation matrices for roi_align
# (torchvision semantics: aligned=False, sampling_ratio=-1 i.e. adaptive).
# ----------------------------------------------------------------------------
def _axis_interp_weights(start, bin_size, grid, out_len, in_len):
    A = np.zeros((out_len, in_len), dtype=np.float32)
    for pp in range(out_len):
        for g in range(grid):
            c = start + pp * bin_size + (g + 0.5) * bin_size / grid
            if c < -1.0 or c > in_len:
                continue                       # sample fully outside -> contributes 0
            c = max(c, 0.0)
            lo = int(np.floor(c))
            if lo >= in_len - 1:
                lo = in_len - 1
                hi = in_len - 1
                c = float(lo)
            else:
                hi = lo + 1
            frac = c - lo
            A[pp, lo] += 1.0 - frac
            A[pp, hi] += frac
    return A


def _roi_geometry(box, spatial_scale, OH, OW):
    x0, y0, x1, y1 = np.asarray(box, dtype=np.float64) * spatial_scale
    roi_w = max(x1 - x0, 1.0)
    roi_h = max(y1 - y0, 1.0)
    bin_w = roi_w / OW
    bin_h = roi_h / OH
    grid_h = int(math.ceil(roi_h / OH))        # adaptive sampling_ratio (-1)
    grid_w = int(math.ceil(roi_w / OW))
    count = max(grid_h * grid_w, 1)
    return x0, y0, bin_w, bin_h, grid_w, grid_h, count


def _build_roi_align_matrices(boxes, H, W, OH, OW, spatial_scale):
    """Dense [N, OH*OW, H*W] interp matrices (used by the pure-JAX reference)."""
    n = boxes.shape[0]
    M = np.zeros((n, OH * OW, H * W), dtype=np.float32)
    for i in range(n):
        x0, y0, bin_w, bin_h, gw, gh, count = _roi_geometry(boxes[i], spatial_scale, OH, OW)
        Ay = _axis_interp_weights(y0, bin_h, gh, OH, H)          # [OH, H]
        Ax = _axis_interp_weights(x0, bin_w, gw, OW, W)          # [OW, W]
        M[i] = (np.einsum('hy,wx->hwyx', Ay, Ax) / count).reshape(OH * OW, H * W)
    return M


def _build_roi_align_matrices_padded(boxes, H, W, OH, OW, spatial_scale):
    """Interp matrices on a replicate-padded (OH+2, OW+2) output grid:
    [N, (OH+2)*(OW+2), H*W].  Padded rows/cols use clamped output coordinates,
    which is exactly the 'replicate' padding of the following 3x3 conv."""
    n = boxes.shape[0]
    PH, PW = OH + 2, OW + 2
    rows = np.clip(np.arange(PH) - 1, 0, OH - 1)
    cols = np.clip(np.arange(PW) - 1, 0, OW - 1)
    M = np.zeros((n, PH * PW, H * W), dtype=np.float32)
    for i in range(n):
        x0, y0, bin_w, bin_h, gw, gh, count = _roi_geometry(boxes[i], spatial_scale, OH, OW)
        Ay = _axis_interp_weights(y0, bin_h, gh, OH, H)[rows]    # [PH, H]
        Ax = _axis_interp_weights(x0, bin_w, gw, OW, W)[cols]    # [PW, W]
        M[i] = (np.einsum('hy,wx->hwyx', Ay, Ax) / count).reshape(PH * PW, H * W)
    return M


def _shift_matrices_for_conv(M, OH, OW):
    """Reference-only: fold replicate-padded 3x3 conv taps into the interp
    matrix.  Returns [N, 9, OH*OW, H*W]."""
    n, P, HW = M.shape
    M4 = M.reshape(n, OH, OW, HW)
    taps = []
    for kh in range(3):
        for kw in range(3):
            rows = np.clip(np.arange(OH) + kh - 1, 0, OH - 1)
            cols = np.clip(np.arange(OW) + kw - 1, 0, OW - 1)
            taps.append(M4[:, rows][:, :, cols].reshape(n, P, HW))
    return np.stack(taps, axis=1)


# ----------------------------------------------------------------------------
# Wrapper = RoIExtractor.forward for one feature level / whole list
# ----------------------------------------------------------------------------
def roi_extract_level(bboxes, feature_nchw, spatial_scale, params, roi_size=ROI_SIZE):
    bs, c_in, H, W = feature_nchw.shape
    OH, OW = roi_size
    P = OH * OW
    PAD_P = (OH + 2) * (OW + 2)
    n_rois = int(bboxes.shape[0])
    w9, _bias_unused, gamma, beta = params   # conv bias cancelled by train-mode BN
    c_out = w9.shape[-1]

    boxes_np = np.asarray(bboxes[:, 1:5], dtype=np.float32)
    batch_idx = jnp.asarray(np.asarray(bboxes[:, 0]).round(), dtype=jnp.int32)

    m_pad = jnp.asarray(
        _build_roi_align_matrices_padded(boxes_np, H, W, OH, OW, spatial_scale),
        dtype=jnp.bfloat16)                                           # [N, PAD_P, H*W]

    feat_flat = jnp.transpose(feature_nchw, (0, 2, 3, 1)).reshape(bs, H * W, c_in)
    feat_flat = feat_flat.astype(jnp.bfloat16)                        # [bs, H*W, C_in]
    w_flat = jnp.asarray(w9, jnp.bfloat16).reshape(9 * c_in, c_out)   # [9*C_in, C_out]

    kernel = functools.partial(_roi_conv_kernel, oh=OH, ow=OW)
    conv_out, stats = pl.pallas_call(
        kernel,
        out_shape=(jax.ShapeDtypeStruct((n_rois, P, c_out), jnp.float32),
                   jax.ShapeDtypeStruct((2, c_out), jnp.float32)),
        grid_spec=pltpu.PrefetchScalarGridSpec(
            num_scalar_prefetch=1,                    # batch indices -> SMEM
            grid=(n_rois,),
            in_specs=[
                # per-ROI padded interp matrix  [1, PAD_P, H*W]
                pl.BlockSpec((1, PAD_P, H * W), lambda i, b: (i, 0, 0)),
                # only the one feature image this ROI needs  [1, H*W, C_in]
                pl.BlockSpec((1, H * W, c_in), lambda i, b: (b[i], 0, 0)),
                # fused conv weights, resident (constant block index)
                pl.BlockSpec((9 * c_in, c_out), lambda i, b: (0, 0)),
            ],
            out_specs=[
                pl.BlockSpec((1, P, c_out), lambda i, b: (i, 0, 0)),
                # BN statistics: resident accumulator across the ROI axis
                pl.BlockSpec((2, c_out), lambda i, b: (0, 0)),
            ],
        ),
        # "arbitrary": the stats output block is revisited every iteration.
        compiler_params=pltpu.CompilerParams(dimension_semantics=("arbitrary",)),
    )(batch_idx, m_pad, feat_flat, w_flat)

    # Finalize BatchNorm statistics (train mode: biased batch variance) and
    # fold them with gamma/beta into a single affine (tiny [C_out] math).
    count = jnp.float32(n_rois * P)
    mean = stats[0] / count
    var = stats[1] / count - mean * mean
    inv_std = jax.lax.rsqrt(var + BN_EPS)
    scale = (gamma * inv_std).astype(jnp.float32).reshape(1, c_out)
    shift = (beta - mean * gamma * inv_std).astype(jnp.float32).reshape(1, c_out)

    out = pl.pallas_call(
        _bn_apply_kernel,
        out_shape=jax.ShapeDtypeStruct((n_rois, P, c_out), jnp.float32),
        grid=(n_rois,),
        in_specs=[
            pl.BlockSpec((1, P, c_out), lambda i: (i, 0, 0)),
            pl.BlockSpec((1, c_out), lambda i: (0, 0)),
            pl.BlockSpec((1, c_out), lambda i: (0, 0)),
        ],
        out_specs=pl.BlockSpec((1, P, c_out), lambda i: (i, 0, 0)),
        compiler_params=pltpu.CompilerParams(dimension_semantics=("parallel",)),
    )(conv_out, scale, shift)

    # back to PyTorch NCHW output convention [N, 256, OH, OW]
    return jnp.transpose(out.reshape(n_rois, OH, OW, c_out), (0, 3, 1, 2))


def roi_extractor_forward(bboxes, features, fea_scales, params_list, roi_size=ROI_SIZE):
    ret = []
    for k in range(len(features)):
        ret.append(roi_extract_level(bboxes, features[k], fea_scales[k],
                                     params_list[k], roi_size))
    return ret


# ----------------------------------------------------------------------------
# Pure-JAX reference (mirrors PyTorch exactly, incl. conv bias; independent
# dense 9-tap construction) for the correctness check.
# ----------------------------------------------------------------------------
def _reference_level(bboxes, feature_nchw, spatial_scale, params, roi_size=ROI_SIZE):
    bs, c_in, H, W = feature_nchw.shape
    OH, OW = roi_size
    n = bboxes.shape[0]
    w9, bias, gamma, beta = params
    c_out = w9.shape[-1]
    boxes_np = np.asarray(bboxes[:, 1:5], dtype=np.float32)
    batch_idx = np.asarray(bboxes[:, 0]).round().astype(np.int32)
    ms = _shift_matrices_for_conv(
        _build_roi_align_matrices(boxes_np, H, W, OH, OW, spatial_scale), OH, OW)
    feat_flat = jnp.transpose(feature_nchw, (0, 2, 3, 1)).reshape(bs, H * W, c_in)
    f_sel = feat_flat[batch_idx]                                   # [N, H*W, C_in]
    roi9 = jnp.einsum('nkpx,nxc->nkpc', jnp.asarray(ms), f_sel)    # [N, 9, P, C_in]
    y = jnp.einsum('nkpc,kco->npo', roi9, w9) + bias.reshape(1, 1, c_out)
    mean = y.mean(axis=(0, 1), keepdims=True)
    var = ((y - mean) ** 2).mean(axis=(0, 1), keepdims=True)
    y = ((y - mean) * jax.lax.rsqrt(var + BN_EPS) * gamma.reshape(1, 1, c_out)
         + beta.reshape(1, 1, c_out))
    return jnp.transpose(y.reshape(n, OH, OW, c_out), (0, 3, 1, 2))


if __name__ == "__main__":
    key = jax.random.PRNGKey(0)
    k_feat, k_w, k_b, k_g, k_beta = jax.random.split(key, 5)

    bs, c_in, H, W = 2, 32, 16, 16
    c_out = 256                       # RoIExtractor hardcodes 256 output channels
    fea_scales = [0.5]                # bbox coords on a 32x32 image -> 16x16 feature

    features = [jax.random.normal(k_feat, (bs, c_in, H, W), jnp.float32)]

    # bboxes: [N, 5] with [batch_idx, x0, y0, x1, y1]
    bboxes = jnp.array([[0.0,  2.0,  3.0, 20.0, 18.0],
                        [1.0,  5.0,  1.0, 30.0, 28.0],
                        [0.0,  0.0,  0.0, 31.0, 31.0],
                        [1.0,  8.0,  8.0, 16.0, 24.0]], dtype=jnp.float32)

    # Deterministic synthetic parameters: Conv2d(c_in, 256, 3) + BatchNorm2d(256)
    w_pt = jax.random.normal(k_w, (c_out, c_in, 3, 3), jnp.float32) / math.sqrt(9 * c_in)
    b_conv = 0.05 * jax.random.normal(k_b, (c_out,), jnp.float32)
    gamma = 1.0 + 0.1 * jax.random.normal(k_g, (c_out,), jnp.float32)
    beta = 0.1 * jax.random.normal(k_beta, (c_out,), jnp.float32)

    # [C_out, C_in, 3, 3] -> per-tap weights [9, C_in, C_out] (tap order kh*3+kw)
    w9 = jnp.transpose(w_pt, (2, 3, 1, 0)).reshape(9, c_in, c_out)
    params_list = [(w9, b_conv, gamma, beta)]

    outs = roi_extractor_forward(bboxes, features, fea_scales, params_list)
    outs = [jax.block_until_ready(o) for o in outs]

    assert outs[0].shape == (bboxes.shape[0], c_out, ROI_SIZE[0], ROI_SIZE[1])
    ref = _reference_level(bboxes, features[0], fea_scales[0], params_list[0])
    np.testing.assert_allclose(np.asarray(outs[0]), np.asarray(ref),
                               rtol=5e-2, atol=5e-2)
    print("KERNEL_OK")
</pallas_src>

<mosaic_0001>
module attributes {stable_mosaic.version = 11 : i64} {
  func.func @_roi_conv_kernel(%arg0: i32, %arg1: memref<4xi32, #tpu.memory_space<smem>>, %arg2: memref<1x256x256xbf16, #tpu.memory_space<vmem>>, %arg3: memref<1x256x32xbf16, #tpu.memory_space<vmem>>, %arg4: memref<288x256xbf16, #tpu.memory_space<vmem>>, %arg5: memref<1x196x256xf32, #tpu.memory_space<vmem>>, %arg6: memref<2x256xf32, #tpu.memory_space<vmem>>) attributes {dimension_semantics = [#tpu.dimension_semantics<arbitrary>], iteration_bounds = array<i64: 4>, scalar_prefetch = 1 : i64, scratch_operands = 0 : i64, tpu.core_type = #tpu.core_type<tc>, window_params = [{transform_indices = @transform_0, window_bounds = array<i64: 1, 256, 256>}, {transform_indices = @transform_1, window_bounds = array<i64: 1, 256, 32>}, {pipeline_mode = #tpu.pipeline_mode<synchronous>, transform_indices = @transform_2, window_bounds = array<i64: 288, 256>}, {transform_indices = @transform_3, window_bounds = array<i64: 1, 196, 256>}, {pipeline_mode = #tpu.pipeline_mode<synchronous>, transform_indices = @transform_4, window_bounds = array<i64: 2, 256>}]} {
    %c0 = arith.constant 0 : index
    %c0_0 = arith.constant 0 : index
    %c0_1 = arith.constant 0 : index
    %0 = vector.load %arg2[%c0, %c0_0, %c0_1] : memref<1x256x256xbf16, #tpu.memory_space<vmem>>, vector<1x256x256xbf16>
    %1 = vector.shape_cast %0 : vector<1x256x256xbf16> to vector<256x256xbf16>
    %c0_2 = arith.constant 0 : index
    %c0_3 = arith.constant 0 : index
    %c0_4 = arith.constant 0 : index
    %2 = vector.load %arg3[%c0_2, %c0_3, %c0_4] : memref<1x256x32xbf16, #tpu.memory_space<vmem>>, vector<1x256x32xbf16>
    %3 = vector.shape_cast %2 : vector<1x256x32xbf16> to vector<256x32xbf16>
    %cst = arith.constant dense<0.000000e+00> : vector<256x32xf32>
    %4 = tpu.matmul %1, %3, %cst {dimension_numbers = #tpu.dot_dimension_numbers<[1], [0], [0], [1], [0, 0, 1, 1], [], []>} : vector<256x256xbf16>, vector<256x32xbf16>, vector<256x32xf32> -> vector<256x32xf32>
    %5 = vector.shape_cast %4 : vector<256x32xf32> to vector<16x16x32xf32>
    %6 = vector.extract_strided_slice %5 {offsets = [0, 0, 0], sizes = [14, 14, 32], strides = [1, 1, 1]} : vector<16x16x32xf32> to vector<14x14x32xf32>
    %7 = vector.extract_strided_slice %5 {offsets = [0, 1, 0], sizes = [14, 14, 32], strides = [1, 1, 1]} : vector<16x16x32xf32> to vector<14x14x32xf32>
    %8 = vector.extract_strided_slice %5 {offsets = [0, 2, 0], sizes = [14, 14, 32], strides = [1, 1, 1]} : vector<16x16x32xf32> to vector<14x14x32xf32>
    %9 = vector.extract_strided_slice %5 {offsets = [1, 0, 0], sizes = [14, 14, 32], strides = [1, 1, 1]} : vector<16x16x32xf32> to vector<14x14x32xf32>
    %10 = vector.extract_strided_slice %5 {offsets = [1, 1, 0], sizes = [14, 14, 32], strides = [1, 1, 1]} : vector<16x16x32xf32> to vector<14x14x32xf32>
    %11 = vector.extract_strided_slice %5 {offsets = [1, 2, 0], sizes = [14, 14, 32], strides = [1, 1, 1]} : vector<16x16x32xf32> to vector<14x14x32xf32>
    %12 = vector.extract_strided_slice %5 {offsets = [2, 0, 0], sizes = [14, 14, 32], strides = [1, 1, 1]} : vector<16x16x32xf32> to vector<14x14x32xf32>
    %13 = vector.extract_strided_slice %5 {offsets = [2, 1, 0], sizes = [14, 14, 32], strides = [1, 1, 1]} : vector<16x16x32xf32> to vector<14x14x32xf32>
    %14 = vector.extract_strided_slice %5 {offsets = [2, 2, 0], sizes = [14, 14, 32], strides = [1, 1, 1]} : vector<16x16x32xf32> to vector<14x14x32xf32>
    %15 = tpu.concatenate %6, %7, %8, %9, %10, %11, %12, %13, %14 in 2 : vector<14x14x32xf32>, vector<14x14x32xf32>, vector<14x14x32xf32>, vector<14x14x32xf32>, vector<14x14x32xf32>, vector<14x14x32xf32>, vector<14x14x32xf32>, vector<14x14x32xf32>, vector<14x14x32xf32> -> vector<14x14x288xf32>
    %16 = vector.shape_cast %15 : vector<14x14x288xf32> to vector<196x288xf32>
    %17 = arith.truncf %16 : vector<196x288xf32> to vector<196x288xbf16>
    %c0_5 = arith.constant 0 : index
    %c0_6 = arith.constant 0 : index
    %18 = vector.load %arg4[%c0_5, %c0_6] : memref<288x256xbf16, #tpu.memory_space<vmem>>, vector<288x256xbf16>
    %cst_7 = arith.constant dense<0.000000e+00> : vector<196x256xf32>
    %19 = tpu.matmul %17, %18, %cst_7 {dimension_numbers = #tpu.dot_dimension_numbers<[1], [0], [0], [1], [0, 0, 1, 1], [], []>} : vector<196x288xbf16>, vector<288x256xbf16>, vector<196x256xf32> -> vector<196x256xf32>
    %c0_8 = arith.constant 0 : index
    %c0_9 = arith.constant 0 : index
    %c0_10 = arith.constant 0 : index
    %20 = vector.load %arg5[%c0_8, %c0_9, %c0_10] : memref<1x196x256xf32, #tpu.memory_space<vmem>>, vector<1x196x256xf32>
    %21 = vector.shape_cast %20 : vector<1x196x256xf32> to vector<196x256xf32>
    %22 = vector.shape_cast %19 : vector<196x256xf32> to vector<1x196x256xf32>
    tpu.vector_store %arg5[%c0_8, %c0_9, %c0_10], %22 {strides = array<i32>} : memref<1x196x256xf32, #tpu.memory_space<vmem>>, vector<1x196x256xf32>,
    %c0_i32 = arith.constant 0 : i32
    %23 = arith.cmpi eq, %arg0, %c0_i32 : i32
    %24 = arith.extui %23 : i1 to i32
    %c0_i32_11 = arith.constant 0 : i32
    %25 = arith.cmpi ne, %24, %c0_i32_11 : i32
    scf.if %25 {
      %cst_18 = arith.constant 0.000000e+00 : f32
      %35 = vector.broadcast %cst_18 : f32 to vector<2x256xf32>
      %c0_19 = arith.constant 0 : index
      %c0_20 = arith.constant 0 : index
      %36 = vector.load %arg6[%c0_19, %c0_20] : memref<2x256xf32, #tpu.memory_space<vmem>>, vector<2x256xf32>
      tpu.vector_store %arg6[%c0_19, %c0_20], %35 {strides = array<i32>} : memref<2x256xf32, #tpu.memory_space<vmem>>, vector<2x256xf32>,
    } else {
    }
    %cst_12 = arith.constant dense<0.000000e+00> : vector<256xf32>
    %26 = vector.multi_reduction <add>, %19, %cst_12 [0] : vector<196x256xf32> to vector<256xf32>
    %27 = vector.shape_cast %26 : vector<256xf32> to vector<1x256xf32>
    %28 = arith.mulf %19, %19 : vector<196x256xf32>
    %cst_13 = arith.constant dense<0.000000e+00> : vector<256xf32>
    %29 = vector.multi_reduction <add>, %28, %cst_13 [0] : vector<196x256xf32> to vector<256xf32>
    %30 = vector.shape_cast %29 : vector<256xf32> to vector<1x256xf32>
    %31 = tpu.concatenate %27, %30 in 0 : vector<1x256xf32>, vector<1x256xf32> -> vector<2x256xf32>
    %c0_14 = arith.constant 0 : index
    %c0_15 = arith.constant 0 : index
    %32 = vector.load %arg6[%c0_14, %c0_15] : memref<2x256xf32, #tpu.memory_space<vmem>>, vector<2x256xf32>
    %33 = arith.addf %32, %31 : vector<2x256xf32>
    %c0_16 = arith.constant 0 : index
    %c0_17 = arith.constant 0 : index
    %34 = vector.load %arg6[%c0_16, %c0_17] : memref<2x256xf32, #tpu.memory_space<vmem>>, vector<2x256xf32>
    tpu.vector_store %arg6[%c0_16, %c0_17], %33 {strides = array<i32>} : memref<2x256xf32, #tpu.memory_space<vmem>>, vector<2x256xf32>,
    return
  }
  func.func @transform_0(%arg0: i32, %arg1: memref<4xi32, #tpu.memory_space<smem>>) -> (i32, i32, i32) {
    %c0_i32 = arith.constant 0 : i32
    %c0_i32_0 = arith.constant 0 : i32
    %c0_i32_1 = arith.constant 0 : i32
    return %arg0, %c0_i32, %c0_i32_0 : i32, i32, i32
  }
  func.func @transform_1(%arg0: i32, %arg1: memref<4xi32, #tpu.memory_space<smem>>) -> (i32, i32, i32) {
    %0 = arith.index_cast %arg0 : i32 to index
    %1 = memref.load %arg1[%0] : memref<4xi32, #tpu.memory_space<smem>>
    %c0_i32 = arith.constant 0 : i32
    %c0_i32_0 = arith.constant 0 : i32
    %c0_i32_1 = arith.constant 0 : i32
    return %1, %c0_i32, %c0_i32_0 : i32, i32, i32
  }
  func.func @transform_2(%arg0: i32, %arg1: memref<4xi32, #tpu.memory_space<smem>>) -> (i32, i32) {
    %c0_i32 = arith.constant 0 : i32
    %c0_i32_0 = arith.constant 0 : i32
    %c0_i32_1 = arith.constant 0 : i32
    return %c0_i32, %c0_i32_0 : i32, i32
  }
  func.func @transform_3(%arg0: i32, %arg1: memref<4xi32, #tpu.memory_space<smem>>) -> (i32, i32, i32) {
    %c0_i32 = arith.constant 0 : i32
    %c0_i32_0 = arith.constant 0 : i32
    %c0_i32_1 = arith.constant 0 : i32
    return %arg0, %c0_i32, %c0_i32_0 : i32, i32, i32
  }
  func.func @transform_4(%arg0: i32, %arg1: memref<4xi32, #tpu.memory_space<smem>>) -> (i32, i32) {
    %c0_i32 = arith.constant 0 : i32
    %c0_i32_0 = arith.constant 0 : i32
    %c0_i32_1 = arith.constant 0 : i32
    return %c0_i32, %c0_i32_0 : i32, i32
  }
}

</mosaic_0001>

<llo_original>
// kernel: tpu_custom_call.1
$region0: #{tpu_custom_call.1}
  #allocation0 [shape = 'u32[]', space=smem, size = 0x4, offset = 0x4, fixed_abs, tag = 'smem constant byte address 0x4 - core index']
  #allocation1 [shape = 'u32[72,128]{1,0:T(1,128)}', space=vmem, size = 0x9000, scoped, tag = 'internal scratch']
  #allocation2 [shape = 's32[1]{0}', space=sflag, size = 0x4, scoped, tag = 'scoped memory for tpu_custom_call.1']
  #allocation3 [shape = 'u8[512]{0}', space=smem, size = 0x200, scoped, tag = 'prefetched SMEM operand 0']
  %s0 = inlined_call_operand.vmem [shape: s32[4], index: 0, kind: input, shape index: {}]
  %s1 = inlined_call_operand.hbm [shape: bf16[4,256,256], index: 1, kind: input, shape index: {}]
  %s2 = inlined_call_operand.vmem [shape: bf16[2,256,32], index: 2, kind: input, shape index: {}]
  %s3 = inlined_call_operand.vmem [shape: bf16[288,256], index: 3, kind: input, shape index: {}]
  %s4 = inlined_call_operand.vmem [shape: f32[4,196,256], index: 4, kind: output, shape index: {0}]
  %s5 = inlined_call_operand.hbm [shape: f32[2,256], index: 5, kind: output, shape index: {1}]
  %6 = xla_tuple %s4, %s5
  %s7 = sld [smem:[#allocation0]]
  $region61: #{tpu_custom_call.1} parent=0
    _
  %s9 = ssub.s32 1, %s7
  %s10 = scalar_select 0, %s9, %s7
  %s12 = sshll.u32 %s0, 4
  %s13 = int_to_ptr.vmem [resolvable:$true] %s12
  %15 = dma.vmem_to_smem %s13, 16, [#allocation3], [#allocation2]
  %17 = dma.done [#allocation2], 16
  %18 = sfence
  $region1: #{tpu_custom_call.1} parent=0
    #allocation4 [shape = 'u8[262144]{0}', space=vmem, size = 0x40000, scoped, tag = 'input window, operand 1']
    #allocation5 [shape = 's32[2]{0}', space=sflag, size = 0x8, scoped, tag = 'scoped memory for tpu_custom_call.1']
    #allocation6 [shape = 's32[2]{0}', space=sflag, size = 0x8, scoped, tag = 'scoped memory for tpu_custom_call.1']
    #allocation7 [shape = 'u8[2048]{0}', space=vmem, size = 0x800, scoped, tag = 'output window, operand 1, single buffered']
    %19 = vsyncpa [#allocation5], 0
    %s20 = scalar_lea.sflag [#allocation5], 1
    %21 = vsyncpa %s20, 0
    %22 = vsyncpa [#allocation6], 0
    loop: start=0, step=1, limit=6
    $region2: #{tpu_custom_call.1} parent=1 // loop_pre_header
      _
    $region3: #{tpu_custom_call.1} parent=1 // loop_header
      %s24 = sphi 0, %s28
      %p25 = scmp.ge.s32.totalorder %s24, 6
      %s34 = sphi 0, %s36
      %s37 = sphi 0, %s34
      %s38 = sphi 0, %s37
      %s54 = sphi 0, %s38
      %s62 = sphi 0, %s64
      %s65 = sphi 0, %s62
      %s66 = sphi 0, %s65
      %s82 = sphi 0, %s66
      %s86 = sphi 0, %s86
      %s88 = sphi 0, %s86
      %s89 = sphi 0, %s88
      %s103 = sphi 0, %s89
      %s109 = sphi 0, %s111
      %s112 = sphi 0, %s109
      %s113 = sphi 0, %s112
      %s129 = sphi 0, %s113
      %s133 = sphi 0, %s133
      %s135 = sphi 0, %s133
      %s136 = sphi 0, %s135
      %s150 = sphi 0, %s136
    $region4: #{tpu_custom_call.1} parent=1 // loop_header_branch
      %27 = sbr.rel (%p25) target = $region8
    $region5: #{tpu_custom_call.1} parent=1 // loop_body
      %s29 = ssub.s32 %s24, 1
      %s30 = ssub.s32 %s24, 2
      %s31 = sadd.s32 %s24, 1
      %s32 = ssub.s32 %s24, %s31
      %p33 = scmp.eq.s32.totalorder %s32, 0
      %s35 = sadd.s32 %s34, 1
      %s36 = scalar_select %p33, %s34, %s35
      %p39 = pneg %p33
      %p40 = scmp.eq.s32.totalorder %s24, 3
      %p41 = por %p39, %p40
      %p42 = scmp.ne.s32.totalorder %s34, %s37
      %p43 = scmp.eq.s32.totalorder %s24, 0
      %p44 = por %p42, %p43
      %p45 = scmp.ne.s32.totalorder %s34, %s37
      %p46 = scmp.eq.s32.totalorder %s29, 3
      %p47 = por %p45, %p46
      %p48 = scmp.ne.s32.totalorder %s37, %s38
      %p49 = scmp.eq.s32.totalorder %s29, 0
      %p50 = por %p48, %p49
      %p51 = scmp.ne.s32.totalorder %s37, %s38
      %p52 = scmp.eq.s32.totalorder %s30, 3
      %p53 = por %p51, %p52
      %p55 = scmp.ne.s32.totalorder %s38, %s54
      %p56 = scmp.eq.s32.totalorder %s30, 0
      %p57 = por %p55, %p56
      %s58 = sld [smem:[#allocation3 + %s24]]
      %s59 = sld [smem:[#allocation3 + %s31]]
      %s60 = ssub.s32 %s58, %s59
      %p61 = scmp.eq.s32.totalorder %s60, 0
      %s63 = sadd.s32 %s62, 1
      %s64 = scalar_select %p61, %s62, %s63
      %p67 = pneg %p61
      %p68 = scmp.eq.s32.totalorder %s24, 3
      %p69 = por %p67, %p68
      %p70 = scmp.ne.s32.totalorder %s62, %s65
      %p71 = scmp.eq.s32.totalorder %s24, 0
      %p72 = por %p70, %p71
      %p73 = scmp.ne.s32.totalorder %s62, %s65
      %p74 = scmp.eq.s32.totalorder %s29, 3
      %p75 = por %p73, %p74
      %p76 = scmp.ne.s32.totalorder %s65, %s66
      %p77 = scmp.eq.s32.totalorder %s29, 0
      %p78 = por %p76, %p77
      %p79 = scmp.ne.s32.totalorder %s65, %s66
      %p80 = scmp.eq.s32.totalorder %s30, 3
      %p81 = por %p79, %p80
      %p83 = scmp.ne.s32.totalorder %s66, %s82
      %p84 = scmp.eq.s32.totalorder %s30, 0
      %p85 = por %p83, %p84
      %s87 = sadd.s32 %s86, 1
      %p90 = scmp.eq.s32.totalorder %s24, 3
      %p91 = scmp.ne.s32.totalorder %s86, %s88
      %p92 = scmp.eq.s32.totalorder %s24, 0
      %p93 = por %p91, %p92
      %p94 = scmp.ne.s32.totalorder %s86, %s88
      %p95 = scmp.eq.s32.totalorder %s29, 3
      %p96 = por %p94, %p95
      %p97 = scmp.ne.s32.totalorder %s88, %s89
      %p98 = scmp.eq.s32.totalorder %s29, 0
      %p99 = por %p97, %p98
      %p100 = scmp.ne.s32.totalorder %s88, %s89
      %p101 = scmp.eq.s32.totalorder %s30, 3
      %p102 = por %p100, %p101
      %p104 = scmp.ne.s32.totalorder %s89, %s103
      %p105 = scmp.eq.s32.totalorder %s30, 0
      %p106 = por %p104, %p105
      %s107 = ssub.s32 %s24, %s31
      %p108 = scmp.eq.s32.totalorder %s107, 0
      %s110 = sadd.s32 %s109, 1
      %s111 = scalar_select %p108, %s109, %s110
      %p114 = pneg %p108
      %p115 = scmp.eq.s32.totalorder %s24, 3
      %p116 = por %p114, %p115
      %p117 = scmp.ne.s32.totalorder %s109, %s112
      %p118 = scmp.eq.s32.totalorder %s24, 0
      %p119 = por %p117, %p118
      %p120 = scmp.ne.s32.totalorder %s109, %s112
      %p121 = scmp.eq.s32.totalorder %s29, 3
      %p122 = por %p120, %p121
      %p123 = scmp.ne.s32.totalorder %s112, %s113
      %p124 = scmp.eq.s32.totalorder %s29, 0
      %p125 = por %p123, %p124
      %p126 = scmp.ne.s32.totalorder %s112, %s113
      %p127 = scmp.eq.s32.totalorder %s30, 3
      %p128 = por %p126, %p127
      %p130 = scmp.ne.s32.totalorder %s113, %s129
      %p131 = scmp.eq.s32.totalorder %s30, 0
      %p132 = por %p130, %p131
      %s134 = sadd.s32 %s133, 1
      %p137 = scmp.eq.s32.totalorder %s24, 3
      %p138 = scmp.ne.s32.totalorder %s133, %s135
      %p139 = scmp.eq.s32.totalorder %s24, 0
      %p140 = por %p138, %p139
      %p141 = scmp.ne.s32.totalorder %s133, %s135
      %p142 = scmp.eq.s32.totalorder %s29, 3
      %p143 = por %p141, %p142
      %p144 = scmp.ne.s32.totalorder %s135, %s136
      %p145 = scmp.eq.s32.totalorder %s29, 0
      %p146 = por %p144, %p145
      %p147 = scmp.ne.s32.totalorder %s135, %s136
      %p148 = scmp.eq.s32.totalorder %s30, 3
      %p149 = por %p147, %p148
      %p151 = scmp.ne.s32.totalorder %s136, %s150
      %p152 = scmp.eq.s32.totalorder %s30, 0
      %p153 = por %p151, %p152
      %p154 = scmp.le.s32.totalorder 1, %s24
      %p155 = scmp.lt.s32.totalorder %s24, 5
      %p156 = pnand %p154, %p155
      %p157 = pneg %p156
      // Predicated region
      $region9: #{tpu_custom_call.1} parent=5 // pred_check
        _
      $region10: #{tpu_custom_call.1} parent=5 // pred_check_branch
        %159 = sbr.rel (%p156) target = $region12
      $region11: #{tpu_custom_call.1} parent=5 // pred_region
        %s160 = ssub.s32 %s24, 1
        // Predicated region
        $region13: #{tpu_custom_call.1} parent=11 // pred_check
          %p161 = pneg %p99
        $region14: #{tpu_custom_call.1} parent=11 // pred_check_branch
          %163 = sbr.rel (%p161) target = $region16
        $region15: #{tpu_custom_call.1} parent=11 // pred_region
          _
        $region16: #{tpu_custom_call.1} parent=11 // pred_fallthru
          _
      $region12: #{tpu_custom_call.1} parent=5 // pred_fallthru
        _
      %p164 = scmp.lt.s32.totalorder %s24, 4
      // Predicated region
      $region17: #{tpu_custom_call.1} parent=5 // pred_check
        %p165 = pneg %p164
      $region18: #{tpu_custom_call.1} parent=5 // pred_check_branch
        %167 = sbr.rel (%p165) target = $region20
      $region19: #{tpu_custom_call.1} parent=5 // pred_region
        // Predicated region
        $region21: #{tpu_custom_call.1} parent=19 // pred_check
          %p168 = pneg %p44
        $region22: #{tpu_custom_call.1} parent=19 // pred_check_branch
          %170 = sbr.rel (%p168) target = $region24
        $region23: #{tpu_custom_call.1} parent=19 // pred_region
          %s171 = sand.u32 %s34, 1
          %s172 = scalar_lea.sflag [#allocation5], %s171
          %s173 = sand.u32 %s34, 1
          %s174 = smul.addr %s173, 256
          %s175 = scalar_lea.vmem [#allocation4], %s174
          %177 = vsyncadd %s172, 0
          %s178 = smul.addr %s24, 64
          %s179 = smul.addr %s178, 4
          %s180 = scalar_lea.hbm %s1, %s179
          %s181 = sshll.u32 %s180, 4
          %s182 = int_to_ptr.hbm [resolvable:$true] %s181
          %s183 = sshll.u32 %s175, 4
          %s184 = int_to_ptr.vmem [resolvable:$true] %s183
          %189 = dma.hbm_to_vmem [thread:$0]  %s182, 4096, %s184, %s172, 128, 128, 8
        $region24: #{tpu_custom_call.1} parent=19 // pred_fallthru
          _
        // Predicated region
        $region25: #{tpu_custom_call.1} parent=19 // pred_check
          %p190 = pneg %p72
        $region26: #{tpu_custom_call.1} parent=19 // pred_check_branch
          %192 = sbr.rel (%p190) target = $region28
        $region27: #{tpu_custom_call.1} parent=19 // pred_region
          %s193 = sld [smem:[#allocation3 + %s24]]
          %p194 = scmp.lt.s32.totalorder %s193, 1
          %s195 = scalar_select %p194, %s193, 1
          %s196 = smul.addr %s195, 32
          %s197 = smul.addr %s196, 4
          %s198 = scalar_lea.vmem %s2, %s197
          %s199 = sld [smem:[#allocation3 + %s24]]
        $region28: #{tpu_custom_call.1} parent=19 // pred_fallthru
          _
      $region20: #{tpu_custom_call.1} parent=5 // pred_fallthru
        _
      %p200 = scmp.le.s32.totalorder 1, %s24
      %p201 = scmp.lt.s32.totalorder %s24, 5
      %p202 = pnand %p200, %p201
      %p203 = pneg %p202
      // Predicated region
      $region29: #{tpu_custom_call.1} parent=5 // pred_check
        _
      $region30: #{tpu_custom_call.1} parent=5 // pred_check_branch
        %205 = sbr.rel (%p202) target = $region32
      $region31: #{tpu_custom_call.1} parent=5 // pred_region
        %s206 = ssub.s32 %s24, 1
        %s207 = sand.u32 %s37, 1
        %s208 = scalar_lea.sflag [#allocation5], %s207
        %s209 = sand.u32 %s37, 1
        %s210 = smul.addr %s209, 256
        %s211 = scalar_lea.vmem [#allocation4], %s210
        // Predicated region
        $region33: #{tpu_custom_call.1} parent=31 // pred_check
          %p212 = pneg %p50
        $region34: #{tpu_custom_call.1} parent=31 // pred_check_branch
          %214 = sbr.rel (%p212) target = $region36
        $region35: #{tpu_custom_call.1} parent=31 // pred_region
          %216 = dma.done %s208, 4096
        $region36: #{tpu_custom_call.1} parent=31 // pred_fallthru
          _
        %s217 = sand.u32 %s37, 1
        %s218 = scalar_lea.sflag [#allocation5], %s217
        %s219 = sand.u32 %s37, 1
        %s220 = smul.addr %s219, 256
        %s221 = scalar_lea.vmem [#allocation4], %s220
        %p222 = pneg %p50
        %p223 = pneg %p47
        %s224 = sld [smem:[#allocation3 + %s29]]
        %p225 = scmp.lt.s32.totalorder %s224, 1
        %s226 = scalar_select %p225, %s224, 1
        %s227 = smul.addr %s226, 32
        %s228 = smul.addr %s227, 4
        %s229 = scalar_lea.vmem %s2, %s228
        %p230 = pneg %p78
        %p231 = pneg %p75
        %p232 = pneg %p99
        %p233 = pneg %p96
        %p234 = pneg %p125
        %p235 = pneg %p122
        %p236 = scmp.lt.s32.totalorder %s29, 3
        %s237 = scalar_select %p236, %s29, 3
        %s238 = smul.addr %s237, 50
        %s239 = smul.addr %s238, 8
        %s240 = scalar_lea.vmem %s4, %s239
        %p241 = pneg %p146
        %p242 = pneg %p143
        %s243 = sld [smem:[#allocation3 + %s29]]
        %p244 = scmp.lt.s32.totalorder %s243, 1
        %s245 = scalar_select %p244, %s243, 1
        %s246 = smul.addr %s245, 32
        %s247 = smul.addr %s246, 4
        %s248 = scalar_lea.vmem %s2, %s247
        %s249 = sld [smem:[#allocation3 + %s29]]
        %p250 = scmp.lt.s32.totalorder %s29, 3
        %s251 = scalar_select %p250, %s29, 3
        %s252 = smul.addr %s251, 50
        %s253 = smul.addr %s252, 8
        %s254 = scalar_lea.vmem %s4, %s253
        %v256 = vld [vmem:[%s211] sm:$0xff]
        %v257 = vld [vmem:[%s211 + $0x8] sm:$0xff]
        %v258 = vld [vmem:[%s211 + $0x10] sm:$0xff]
        %v259 = vld [vmem:[%s211 + $0x18] sm:$0xff]
        %v260 = vld [vmem:[%s211 + $0x20] sm:$0xff]
        %v261 = vld [vmem:[%s211 + $0x28] sm:$0xff]
        %v262 = vld [vmem:[%s211 + $0x30] sm:$0xff]
        %v263 = vld [vmem:[%s211 + $0x38] sm:$0xff]
        %v264 = vld [vmem:[%s211 + $0x40] sm:$0xff]
        %v265 = vld [vmem:[%s211 + $0x48] sm:$0xff]
        %v266 = vld [vmem:[%s211 + $0x50] sm:$0xff]
        %v267 = vld [vmem:[%s211 + $0x58] sm:$0xff]
        %v268 = vld [vmem:[%s211 + $0x60] sm:$0xff]
        %v269 = vld [vmem:[%s211 + $0x68] sm:$0xff]
        %v270 = vld [vmem:[%s211 + $0x70] sm:$0xff]
        %v271 = vld [vmem:[%s211 + $0x78] sm:$0xff]
        %v272 = vld [vmem:[%s211 + $0x80] sm:$0xff]
        %v273 = vld [vmem:[%s211 + $0x88] sm:$0xff]
        %v274 = vld [vmem:[%s211 + $0x90] sm:$0xff]
        %v275 = vld [vmem:[%s211 + $0x98] sm:$0xff]
        %v276 = vld [vmem:[%s211 + $0xa0] sm:$0xff]
        %v277 = vld [vmem:[%s211 + $0xa8] sm:$0xff]
        %v278 = vld [vmem:[%s211 + $0xb0] sm:$0xff]
        %v279 = vld [vmem:[%s211 + $0xb8] sm:$0xff]
        %v280 = vld [vmem:[%s211 + $0xc0] sm:$0xff]
        %v281 = vld [vmem:[%s211 + $0xc8] sm:$0xff]
        %v282 = vld [vmem:[%s211 + $0xd0] sm:$0xff]
        %v283 = vld [vmem:[%s211 + $0xd8] sm:$0xff]
        %v284 = vld [vmem:[%s211 + $0xe0] sm:$0xff]
        %v285 = vld [vmem:[%s211 + $0xe8] sm:$0xff]
        %v286 = vld [vmem:[%s211 + $0xf0] sm:$0xff]
        %v287 = vld [vmem:[%s211 + $0xf8] sm:$0xff]
        %v288 = vld [vmem:[%s248] sm:$0xf]
        %v289 = vld [vmem:[%s248 + $0x4] sm:$0xf]
        %v290 = vld [vmem:[%s248 + $0x8] sm:$0xf]
        %v291 = vld [vmem:[%s248 + $0xc] sm:$0xf]
        %v292 = vld [vmem:[%s248 + $0x10] sm:$0xf]
        %v293 = vld [vmem:[%s248 + $0x14] sm:$0xf]
        %v294 = vld [vmem:[%s248 + $0x18] sm:$0xf]
        %v295 = vld [vmem:[%s248 + $0x1c] sm:$0xf]
        %v296 = vld [vmem:[%s248 + $0x20] sm:$0xf]
        %v297 = vld [vmem:[%s248 + $0x24] sm:$0xf]
        %v298 = vld [vmem:[%s248 + $0x28] sm:$0xf]
        %v299 = vld [vmem:[%s248 + $0x2c] sm:$0xf]
        %v300 = vld [vmem:[%s248 + $0x30] sm:$0xf]
        %v301 = vld [vmem:[%s248 + $0x34] sm:$0xf]
        %v302 = vld [vmem:[%s248 + $0x38] sm:$0xf]
        %v303 = vld [vmem:[%s248 + $0x3c] sm:$0xf]
        %v304 = vld [vmem:[%s248 + $0x40] sm:$0xf]
        %v305 = vld [vmem:[%s248 + $0x44] sm:$0xf]
        %v306 = vld [vmem:[%s248 + $0x48] sm:$0xf]
        %v307 = vld [vmem:[%s248 + $0x4c] sm:$0xf]
        %v308 = vld [vmem:[%s248 + $0x50] sm:$0xf]
        %v309 = vld [vmem:[%s248 + $0x54] sm:$0xf]
        %v310 = vld [vmem:[%s248 + $0x58] sm:$0xf]
        %v311 = vld [vmem:[%s248 + $0x5c] sm:$0xf]
        %v312 = vld [vmem:[%s248 + $0x60] sm:$0xf]
        %v313 = vld [vmem:[%s248 + $0x64] sm:$0xf]
        %v314 = vld [vmem:[%s248 + $0x68] sm:$0xf]
        %v315 = vld [vmem:[%s248 + $0x6c] sm:$0xf]
        %v316 = vld [vmem:[%s248 + $0x70] sm:$0xf]
        %v317 = vld [vmem:[%s248 + $0x74] sm:$0xf]
        %v318 = vld [vmem:[%s248 + $0x78] sm:$0xf]
        %v319 = vld [vmem:[%s248 + $0x7c] sm:$0xf]
        %v352 = vunpack.c.l.b16 %v256
        %v353 = vunpack.c.h.b16 %v256
        %v354 = vunpack.c.l.b16 %v257
        %v355 = vunpack.c.h.b16 %v257
        %v356 = vunpack.c.l.b16 %v258
        %v357 = vunpack.c.h.b16 %v258
        %v358 = vunpack.c.l.b16 %v259
        %v359 = vunpack.c.h.b16 %v259
        %v360 = vunpack.c.l.b16 %v260
        %v361 = vunpack.c.h.b16 %v260
        %v362 = vunpack.c.l.b16 %v261
        %v363 = vunpack.c.h.b16 %v261
        %v364 = vunpack.c.l.b16 %v262
        %v365 = vunpack.c.h.b16 %v262
        %v366 = vunpack.c.l.b16 %v263
        %v367 = vunpack.c.h.b16 %v263
        %v368 = vunpack.c.l.b16 %v264
        %v369 = vunpack.c.h.b16 %v264
        %v370 = vunpack.c.l.b16 %v265
        %v371 = vunpack.c.h.b16 %v265
        %v372 = vunpack.c.l.b16 %v266
        %v373 = vunpack.c.h.b16 %v266
        %v374 = vunpack.c.l.b16 %v267
        %v375 = vunpack.c.h.b16 %v267
        %v376 = vunpack.c.l.b16 %v268
        %v377 = vunpack.c.h.b16 %v268
        %v378 = vunpack.c.l.b16 %v269
        %v379 = vunpack.c.h.b16 %v269
        %v380 = vunpack.c.l.b16 %v270
        %v381 = vunpack.c.h.b16 %v270
        %v382 = vunpack.c.l.b16 %v271
        %v383 = vunpack.c.h.b16 %v271
        %v384 = vunpack.c.l.b16 %v272
        %v385 = vunpack.c.h.b16 %v272
        %v386 = vunpack.c.l.b16 %v273
        %v387 = vunpack.c.h.b16 %v273
        %v388 = vunpack.c.l.b16 %v274
        %v389 = vunpack.c.h.b16 %v274
        %v390 = vunpack.c.l.b16 %v275
        %v391 = vunpack.c.h.b16 %v275
        %v392 = vunpack.c.l.b16 %v276
        %v393 = vunpack.c.h.b16 %v276
        %v394 = vunpack.c.l.b16 %v277
        %v395 = vunpack.c.h.b16 %v277
        %v396 = vunpack.c.l.b16 %v278
        %v397 = vunpack.c.h.b16 %v278
        %v398 = vunpack.c.l.b16 %v279
        %v399 = vunpack.c.h.b16 %v279
        %v400 = vunpack.c.l.b16 %v280
        %v401 = vunpack.c.h.b16 %v280
        %v402 = vunpack.c.l.b16 %v281
        %v403 = vunpack.c.h.b16 %v281
        %v404 = vunpack.c.l.b16 %v282
        %v405 = vunpack.c.h.b16 %v282
        %v406 = vunpack.c.l.b16 %v283
        %v407 = vunpack.c.h.b16 %v283
        %v408 = vunpack.c.l.b16 %v284
        %v409 = vunpack.c.h.b16 %v284
        %v410 = vunpack.c.l.b16 %v285
        %v411 = vunpack.c.h.b16 %v285
        %v412 = vunpack.c.l.b16 %v286
        %v413 = vunpack.c.h.b16 %v286
        %v414 = vunpack.c.l.b16 %v287
        %v415 = vunpack.c.h.b16 %v287
        %v416 = vpack.c.b16 %v354, %v352
        %v417 = vpack.c.b16 %v355, %v353
        %v418 = vpack.c.b16 %v358, %v356
        %v419 = vpack.c.b16 %v359, %v357
        %v420 = vpack.c.b16 %v362, %v360
        %v421 = vpack.c.b16 %v363, %v361
        %v422 = vpack.c.b16 %v366, %v364
        %v423 = vpack.c.b16 %v367, %v365
        %v424 = vpack.c.b16 %v370, %v368
        %v425 = vpack.c.b16 %v371, %v369
        %v426 = vpack.c.b16 %v374, %v372
        %v427 = vpack.c.b16 %v375, %v373
        %v428 = vpack.c.b16 %v378, %v376
        %v429 = vpack.c.b16 %v379, %v377
        %v430 = vpack.c.b16 %v382, %v380
        %v431 = vpack.c.b16 %v383, %v381
        %v432 = vpack.c.b16 %v386, %v384
        %v433 = vpack.c.b16 %v387, %v385
        %v434 = vpack.c.b16 %v390, %v388
        %v435 = vpack.c.b16 %v391, %v389
        %v436 = vpack.c.b16 %v394, %v392
        %v437 = vpack.c.b16 %v395, %v393
        %v438 = vpack.c.b16 %v398, %v396
        %v439 = vpack.c.b16 %v399, %v397
        %v440 = vpack.c.b16 %v402, %v400
        %v441 = vpack.c.b16 %v403, %v401
        %v442 = vpack.c.b16 %v406, %v404
        %v443 = vpack.c.b16 %v407, %v405
        %v444 = vpack.c.b16 %v410, %v408
        %v445 = vpack.c.b16 %v411, %v409
        %v446 = vpack.c.b16 %v414, %v412
        %v447 = vpack.c.b16 %v415, %v413
        %v512 = vunpack.c.l.b16 %v288
        %v513 = vunpack.c.l.b16 %v289
        %v514 = vunpack.c.l.b16 %v290
        %v515 = vunpack.c.l.b16 %v291
        %v516 = vunpack.c.l.b16 %v292
        %v517 = vunpack.c.l.b16 %v293
        %v518 = vunpack.c.l.b16 %v294
        %v519 = vunpack.c.l.b16 %v295
        %v520 = vunpack.c.l.b16 %v296
        %v521 = vunpack.c.l.b16 %v297
        %v522 = vunpack.c.l.b16 %v298
        %v523 = vunpack.c.l.b16 %v299
        %v524 = vunpack.c.l.b16 %v300
        %v525 = vunpack.c.l.b16 %v301
        %v526 = vunpack.c.l.b16 %v302
        %v527 = vunpack.c.l.b16 %v303
        %v528 = vunpack.c.l.b16 %v304
        %v529 = vunpack.c.l.b16 %v305
        %v530 = vunpack.c.l.b16 %v306
        %v531 = vunpack.c.l.b16 %v307
        %v532 = vunpack.c.l.b16 %v308
        %v533 = vunpack.c.l.b16 %v309
        %v534 = vunpack.c.l.b16 %v310
        %v535 = vunpack.c.l.b16 %v311
        %v536 = vunpack.c.l.b16 %v312
        %v537 = vunpack.c.l.b16 %v313
        %v538 = vunpack.c.l.b16 %v314
        %v539 = vunpack.c.l.b16 %v315
        %v540 = vunpack.c.l.b16 %v316
        %v541 = vunpack.c.l.b16 %v317
        %v542 = vunpack.c.l.b16 %v318
        %v543 = vunpack.c.l.b16 %v319
        %v544 = vpack.c.b16 %v513, %v512
        %v545 = vpack.c.b16 %v515, %v514
        %v546 = vpack.c.b16 %v517, %v516
        %v547 = vpack.c.b16 %v519, %v518
        %v548 = vpack.c.b16 %v521, %v520
        %v549 = vpack.c.b16 %v523, %v522
        %v550 = vpack.c.b16 %v525, %v524
        %v551 = vpack.c.b16 %v527, %v526
        %v552 = vpack.c.b16 %v529, %v528
        %v553 = vpack.c.b16 %v531, %v530
        %v554 = vpack.c.b16 %v533, %v532
        %v555 = vpack.c.b16 %v535, %v534
        %v556 = vpack.c.b16 %v537, %v536
        %v557 = vpack.c.b16 %v539, %v538
        %v558 = vpack.c.b16 %v541, %v540
        %v559 = vpack.c.b16 %v543, %v542
        %576 = vmatpush.bf16.msra.mxu0 %v551
        %577 = vmatpush.bf16.msra.mxu0 %v550
        %578 = vmatpush.bf16.msra.mxu0 %v549
        %579 = vmatpush.bf16.msra.mxu0 %v548
        %580 = vmatpush.bf16.msra.mxu0 %v547
        %581 = vmatpush.bf16.msra.mxu0 %v546
        %582 = vmatpush.bf16.msra.mxu0 %v545
        %583 = vmatpush.bf16.msra.mxu0 %v544
        %584 = vmatmul.bf16.gmra.mxu0 %v416
        %v585 = vpop.f32.mrf.mxu0
        %v586 = vadd.f32 0.0, %v585
        %v587 = vpop.f32.mrf.mxu0
        %v588 = vadd.f32 0.0, %v587
        %589 = vmatmul.bf16.gmra.mxu0 %v418
        %v590 = vpop.f32.mrf.mxu0
        %v591 = vadd.f32 0.0, %v590
        %v592 = vpop.f32.mrf.mxu0
        %v593 = vadd.f32 0.0, %v592
        %594 = vmatmul.bf16.gmra.mxu0 %v420
        %v595 = vpop.f32.mrf.mxu0
        %v596 = vadd.f32 0.0, %v595
        %v597 = vpop.f32.mrf.mxu0
        %v598 = vadd.f32 0.0, %v597
        %599 = vmatmul.bf16.gmra.mxu0 %v422
        %v600 = vpop.f32.mrf.mxu0
        %v601 = vadd.f32 0.0, %v600
        %v602 = vpop.f32.mrf.mxu0
        %v603 = vadd.f32 0.0, %v602
        %604 = vmatmul.bf16.gmra.mxu0 %v424
        %v605 = vpop.f32.mrf.mxu0
        %v606 = vadd.f32 0.0, %v605
        %v607 = vpop.f32.mrf.mxu0
        %v608 = vadd.f32 0.0, %v607
        %609 = vmatmul.bf16.gmra.mxu0 %v426
        %v610 = vpop.f32.mrf.mxu0
        %v611 = vadd.f32 0.0, %v610
        %v612 = vpop.f32.mrf.mxu0
        %v613 = vadd.f32 0.0, %v612
        %614 = vmatmul.bf16.gmra.mxu0 %v428
        %v615 = vpop.f32.mrf.mxu0
        %v616 = vadd.f32 0.0, %v615
        %v617 = vpop.f32.mrf.mxu0
        %v618 = vadd.f32 0.0, %v617
        %619 = vmatmul.bf16.gmra.mxu0 %v430
        %v620 = vpop.f32.mrf.mxu0
        %v621 = vadd.f32 0.0, %v620
        %v622 = vpop.f32.mrf.mxu0
        %v623 = vadd.f32 0.0, %v622
        %624 = vmatmul.bf16.gmra.mxu0 %v432
        %v625 = vpop.f32.mrf.mxu0
        %v626 = vadd.f32 0.0, %v625
        %v627 = vpop.f32.mrf.mxu0
        %v628 = vadd.f32 0.0, %v627
        %629 = vmatmul.bf16.gmra.mxu0 %v434
        %v630 = vpop.f32.mrf.mxu0
        %v631 = vadd.f32 0.0, %v630
        %v632 = vpop.f32.mrf.mxu0
        %v633 = vadd.f32 0.0, %v632
        %634 = vmatmul.bf16.gmra.mxu0 %v436
        %v635 = vpop.f32.mrf.mxu0
        %v636 = vadd.f32 0.0, %v635
        %v637 = vpop.f32.mrf.mxu0
        %v638 = vadd.f32 0.0, %v637
        %639 = vmatmul.bf16.gmra.mxu0 %v438
        %v640 = vpop.f32.mrf.mxu0
        %v641 = vadd.f32 0.0, %v640
        %v642 = vpop.f32.mrf.mxu0
        %v643 = vadd.f32 0.0, %v642
        %644 = vmatmul.bf16.gmra.mxu0 %v440
        %v645 = vpop.f32.mrf.mxu0
        %v646 = vadd.f32 0.0, %v645
        %v647 = vpop.f32.mrf.mxu0
        %v648 = vadd.f32 0.0, %v647
        %649 = vmatmul.bf16.gmra.mxu0 %v442
        %v650 = vpop.f32.mrf.mxu0
        %v651 = vadd.f32 0.0, %v650
        %v652 = vpop.f32.mrf.mxu0
        %v653 = vadd.f32 0.0, %v652
        %654 = vmatmul.bf16.gmra.mxu0 %v444
        %v655 = vpop.f32.mrf.mxu0
        %v656 = vadd.f32 0.0, %v655
        %v657 = vpop.f32.mrf.mxu0
        %v658 = vadd.f32 0.0, %v657
        %659 = vmatmul.bf16.gmra.mxu0 %v446
        %v660 = vpop.f32.mrf.mxu0
        %v661 = vadd.f32 0.0, %v660
        %v662 = vpop.f32.mrf.mxu0
        %v663 = vadd.f32 0.0, %v662
        %664 = vdwg.mxu0
        %665 = vmatpush.bf16.msra.mxu0 %v559
        %666 = vmatpush.bf16.msra.mxu0 %v558
        %667 = vmatpush.bf16.msra.mxu0 %v557
        %668 = vmatpush.bf16.msra.mxu0 %v556
        %669 = vmatpush.bf16.msra.mxu0 %v555
        %670 = vmatpush.bf16.msra.mxu0 %v554
        %671 = vmatpush.bf16.msra.mxu0 %v553
        %672 = vmatpush.bf16.msra.mxu0 %v552
        %673 = vmatmul.bf16.gmra.mxu0 %v417
        %v674 = vpop.f32.mrf.mxu0
        %v675 = vadd.f32 %v586, %v674
        %v676 = vpop.f32.mrf.mxu0
        %v677 = vadd.f32 %v588, %v676
        %678 = vmatmul.bf16.gmra.mxu0 %v419
        %v679 = vpop.f32.mrf.mxu0
        %v680 = vadd.f32 %v591, %v679
        %v681 = vpop.f32.mrf.mxu0
        %v682 = vadd.f32 %v593, %v681
        %683 = vmatmul.bf16.gmra.mxu0 %v421
        %v684 = vpop.f32.mrf.mxu0
        %v685 = vadd.f32 %v596, %v684
        %v686 = vpop.f32.mrf.mxu0
        %v687 = vadd.f32 %v598, %v686
        %688 = vmatmul.bf16.gmra.mxu0 %v423
        %v689 = vpop.f32.mrf.mxu0
        %v690 = vadd.f32 %v601, %v689
        %v691 = vpop.f32.mrf.mxu0
        %v692 = vadd.f32 %v603, %v691
        %693 = vmatmul.bf16.gmra.mxu0 %v425
        %v694 = vpop.f32.mrf.mxu0
        %v695 = vadd.f32 %v606, %v694
        %v696 = vpop.f32.mrf.mxu0
        %v697 = vadd.f32 %v608, %v696
        %698 = vmatmul.bf16.gmra.mxu0 %v427
        %v699 = vpop.f32.mrf.mxu0
        %v700 = vadd.f32 %v611, %v699
        %v701 = vpop.f32.mrf.mxu0
        %v702 = vadd.f32 %v613, %v701
        %703 = vmatmul.bf16.gmra.mxu0 %v429
        %v704 = vpop.f32.mrf.mxu0
        %v705 = vadd.f32 %v616, %v704
        %v706 = vpop.f32.mrf.mxu0
        %v707 = vadd.f32 %v618, %v706
        %708 = vmatmul.bf16.gmra.mxu0 %v431
        %v709 = vpop.f32.mrf.mxu0
        %v710 = vadd.f32 %v621, %v709
        %v711 = vpop.f32.mrf.mxu0
        %v712 = vadd.f32 %v623, %v711
        %713 = vmatmul.bf16.gmra.mxu0 %v433
        %v714 = vpop.f32.mrf.mxu0
        %v715 = vadd.f32 %v626, %v714
        %v716 = vpop.f32.mrf.mxu0
        %v717 = vadd.f32 %v628, %v716
        %718 = vmatmul.bf16.gmra.mxu0 %v435
        %v719 = vpop.f32.mrf.mxu0
        %v720 = vadd.f32 %v631, %v719
        %v721 = vpop.f32.mrf.mxu0
        %v722 = vadd.f32 %v633, %v721
        %723 = vmatmul.bf16.gmra.mxu0 %v437
        %v724 = vpop.f32.mrf.mxu0
        %v725 = vadd.f32 %v636, %v724
        %v726 = vpop.f32.mrf.mxu0
        %v727 = vadd.f32 %v638, %v726
        %728 = vmatmul.bf16.gmra.mxu0 %v439
        %v729 = vpop.f32.mrf.mxu0
        %v730 = vadd.f32 %v641, %v729
        %v731 = vpop.f32.mrf.mxu0
        %v732 = vadd.f32 %v643, %v731
        %733 = vmatmul.bf16.gmra.mxu0 %v441
        %v734 = vpop.f32.mrf.mxu0
        %v735 = vadd.f32 %v646, %v734
        %v736 = vpop.f32.mrf.mxu0
        %v737 = vadd.f32 %v648, %v736
        %738 = vmatmul.bf16.gmra.mxu0 %v443
        %v739 = vpop.f32.mrf.mxu0
        %v740 = vadd.f32 %v651, %v739
        %v741 = vpop.f32.mrf.mxu0
        %v742 = vadd.f32 %v653, %v741
        %743 = vmatmul.bf16.gmra.mxu0 %v445
        %v744 = vpop.f32.mrf.mxu0
        %v745 = vadd.f32 %v656, %v744
        %v746 = vpop.f32.mrf.mxu0
        %v747 = vadd.f32 %v658, %v746
        %748 = vmatmul.bf16.gmra.mxu0 %v447
        %v749 = vpop.f32.mrf.mxu0
        %v750 = vadd.f32 %v661, %v749
        %v751 = vpop.f32.mrf.mxu0
        %v752 = vadd.f32 %v663, %v751
        %753 = vdwg.mxu0
        %vm782 = vcmask 1046528
        %v783 = vrot.slane %v675, 1
        %v784 = vrot.slane %v677, 1
        %v785 = vsel %vm782, %v783, %v784
        %v786 = vrot.slane %v680, 1
        %v787 = vrot.slane %v682, 1
        %v788 = vsel %vm782, %v786, %v787
        %v789 = vrot.slane %v685, 1
        %v790 = vrot.slane %v687, 1
        %v791 = vsel %vm782, %v789, %v790
        %v792 = vrot.slane %v690, 1
        %v793 = vrot.slane %v692, 1
        %v794 = vsel %vm782, %v792, %v793
        %v795 = vrot.slane %v695, 1
        %v796 = vrot.slane %v697, 1
        %v797 = vsel %vm782, %v795, %v796
        %v798 = vrot.slane %v700, 1
        %v799 = vrot.slane %v702, 1
        %v800 = vsel %vm782, %v798, %v799
        %v801 = vrot.slane %v705, 1
        %v802 = vrot.slane %v707, 1
        %v803 = vsel %vm782, %v801, %v802
        %v804 = vrot.slane %v710, 1
        %v805 = vrot.slane %v712, 1
        %v806 = vsel %vm782, %v804, %v805
        %v807 = vrot.slane %v715, 1
        %v808 = vrot.slane %v717, 1
        %v809 = vsel %vm782, %v807, %v808
        %v810 = vrot.slane %v720, 1
        %v811 = vrot.slane %v722, 1
        %v812 = vsel %vm782, %v810, %v811
        %v813 = vrot.slane %v725, 1
        %v814 = vrot.slane %v727, 1
        %v815 = vsel %vm782, %v813, %v814
        %v816 = vrot.slane %v730, 1
        %v817 = vrot.slane %v732, 1
        %v818 = vsel %vm782, %v816, %v817
        %v819 = vrot.slane %v735, 1
        %v820 = vrot.slane %v737, 1
        %v821 = vsel %vm782, %v819, %v820
        %v822 = vrot.slane %v740, 1
        %v823 = vrot.slane %v742, 1
        %v824 = vsel %vm782, %v822, %v823
        %825 = vrot.lane.b32.xlu0 %v785, 32
        %v826 = vpop.permute.xlu0 %825
        %827 = vrot.lane.b32.xlu0 %v784, 32
        %v828 = vpop.permute.xlu0 %827
        %829 = vrot.lane.b32.xlu0 %v788, 32
        %v830 = vpop.permute.xlu0 %829
        %831 = vrot.lane.b32.xlu0 %v787, 32
        %v832 = vpop.permute.xlu0 %831
        %833 = vrot.lane.b32.xlu0 %v791, 32
        %v834 = vpop.permute.xlu0 %833
        %835 = vrot.lane.b32.xlu0 %v790, 32
        %v836 = vpop.permute.xlu0 %835
        %837 = vrot.lane.b32.xlu0 %v794, 32
        %v838 = vpop.permute.xlu0 %837
        %839 = vrot.lane.b32.xlu0 %v793, 32
        %v840 = vpop.permute.xlu0 %839
        %841 = vrot.lane.b32.xlu0 %v797, 32
        %v842 = vpop.permute.xlu0 %841
        %843 = vrot.lane.b32.xlu0 %v796, 32
        %v844 = vpop.permute.xlu0 %843
        %845 = vrot.lane.b32.xlu0 %v800, 32
        %v846 = vpop.permute.xlu0 %845
        %847 = vrot.lane.b32.xlu0 %v799, 32
        %v848 = vpop.permute.xlu0 %847
        %849 = vrot.lane.b32.xlu0 %v803, 32
        %v850 = vpop.permute.xlu0 %849
        %851 = vrot.lane.b32.xlu0 %v802, 32
        %v852 = vpop.permute.xlu0 %851
        %853 = vrot.lane.b32.xlu0 %v806, 32
        %v854 = vpop.permute.xlu0 %853
        %855 = vrot.lane.b32.xlu0 %v805, 32
        %v856 = vpop.permute.xlu0 %855
        %857 = vrot.lane.b32.xlu0 %v809, 32
        %v858 = vpop.permute.xlu0 %857
        %859 = vrot.lane.b32.xlu0 %v808, 32
        %v860 = vpop.permute.xlu0 %859
        %861 = vrot.lane.b32.xlu0 %v812, 32
        %v862 = vpop.permute.xlu0 %861
        %863 = vrot.lane.b32.xlu0 %v811, 32
        %v864 = vpop.permute.xlu0 %863
        %865 = vrot.lane.b32.xlu0 %v815, 32
        %v866 = vpop.permute.xlu0 %865
        %867 = vrot.lane.b32.xlu0 %v814, 32
        %v868 = vpop.permute.xlu0 %867
        %869 = vrot.lane.b32.xlu0 %v818, 32
        %v870 = vpop.permute.xlu0 %869
        %871 = vrot.lane.b32.xlu0 %v817, 32
        %v872 = vpop.permute.xlu0 %871
        %873 = vrot.lane.b32.xlu0 %v821, 32
        %v874 = vpop.permute.xlu0 %873
        %875 = vrot.lane.b32.xlu0 %v820, 32
        %v876 = vpop.permute.xlu0 %875
        %877 = vrot.lane.b32.xlu0 %v824, 32
        %v878 = vpop.permute.xlu0 %877
        %879 = vrot.lane.b32.xlu0 %v823, 32
        %v880 = vpop.permute.xlu0 %879
        %vm909 = vcmask 1045504
        %v910 = vrot.slane %v675, 2
        %v911 = vrot.slane %v677, 2
        %v912 = vsel %vm909, %v910, %v911
        %v913 = vrot.slane %v680, 2
        %v914 = vrot.slane %v682, 2
        %v915 = vsel %vm909, %v913, %v914
        %v916 = vrot.slane %v685, 2
        %v917 = vrot.slane %v687, 2
        %v918 = vsel %vm909, %v916, %v917
        %v919 = vrot.slane %v690, 2
        %v920 = vrot.slane %v692, 2
        %v921 = vsel %vm909, %v919, %v920
        %v922 = vrot.slane %v695, 2
        %v923 = vrot.slane %v697, 2
        %v924 = vsel %vm909, %v922, %v923
        %v925 = vrot.slane %v700, 2
        %v926 = vrot.slane %v702, 2
        %v927 = vsel %vm909, %v925, %v926
        %v928 = vrot.slane %v705, 2
        %v929 = vrot.slane %v707, 2
        %v930 = vsel %vm909, %v928, %v929
        %v931 = vrot.slane %v710, 2
        %v932 = vrot.slane %v712, 2
        %v933 = vsel %vm909, %v931, %v932
        %v934 = vrot.slane %v715, 2
        %v935 = vrot.slane %v717, 2
        %v936 = vsel %vm909, %v934, %v935
        %v937 = vrot.slane %v720, 2
        %v938 = vrot.slane %v722, 2
        %v939 = vsel %vm909, %v937, %v938
        %v940 = vrot.slane %v725, 2
        %v941 = vrot.slane %v727, 2
        %v942 = vsel %vm909, %v940, %v941
        %v943 = vrot.slane %v730, 2
        %v944 = vrot.slane %v732, 2
        %v945 = vsel %vm909, %v943, %v944
        %v946 = vrot.slane %v735, 2
        %v947 = vrot.slane %v737, 2
        %v948 = vsel %vm909, %v946, %v947
        %v949 = vrot.slane %v740, 2
        %v950 = vrot.slane %v742, 2
        %v951 = vsel %vm909, %v949, %v950
        %952 = vrot.lane.b32.xlu0 %v912, 64
        %v953 = vpop.permute.xlu0 %952
        %954 = vrot.lane.b32.xlu0 %v911, 64
        %v955 = vpop.permute.xlu0 %954
        %956 = vrot.lane.b32.xlu0 %v915, 64
        %v957 = vpop.permute.xlu0 %956
        %958 = vrot.lane.b32.xlu0 %v914, 64
        %v959 = vpop.permute.xlu0 %958
        %960 = vrot.lane.b32.xlu0 %v918, 64
        %v961 = vpop.permute.xlu0 %960
        %962 = vrot.lane.b32.xlu0 %v917, 64
        %v963 = vpop.permute.xlu0 %962
        %964 = vrot.lane.b32.xlu0 %v921, 64
        %v965 = vpop.permute.xlu0 %964
        %966 = vrot.lane.b32.xlu0 %v920, 64
        %v967 = vpop.permute.xlu0 %966
        %968 = vrot.lane.b32.xlu0 %v924, 64
        %v969 = vpop.permute.xlu0 %968
        %970 = vrot.lane.b32.xlu0 %v923, 64
        %v971 = vpop.permute.xlu0 %970
        %972 = vrot.lane.b32.xlu0 %v927, 64
        %v973 = vpop.permute.xlu0 %972
        %974 = vrot.lane.b32.xlu0 %v926, 64
        %v975 = vpop.permute.xlu0 %974
        %976 = vrot.lane.b32.xlu0 %v930, 64
        %v977 = vpop.permute.xlu0 %976
        %978 = vrot.lane.b32.xlu0 %v929, 64
        %v979 = vpop.permute.xlu0 %978
        %980 = vrot.lane.b32.xlu0 %v933, 64
        %v981 = vpop.permute.xlu0 %980
        %982 = vrot.lane.b32.xlu0 %v932, 64
        %v983 = vpop.permute.xlu0 %982
        %984 = vrot.lane.b32.xlu0 %v936, 64
        %v985 = vpop.permute.xlu0 %984
        %986 = vrot.lane.b32.xlu0 %v935, 64
        %v987 = vpop.permute.xlu0 %986
        %988 = vrot.lane.b32.xlu0 %v939, 64
        %v989 = vpop.permute.xlu0 %988
        %990 = vrot.lane.b32.xlu0 %v938, 64
        %v991 = vpop.permute.xlu0 %990
        %992 = vrot.lane.b32.xlu0 %v942, 64
        %v993 = vpop.permute.xlu0 %992
        %994 = vrot.lane.b32.xlu0 %v941, 64
        %v995 = vpop.permute.xlu0 %994
        %996 = vrot.lane.b32.xlu0 %v945, 64
        %v997 = vpop.permute.xlu0 %996
        %998 = vrot.lane.b32.xlu0 %v944, 64
        %v999 = vpop.permute.xlu0 %998
        %1000 = vrot.lane.b32.xlu0 %v948, 64
        %v1001 = vpop.permute.xlu0 %1000
        %1002 = vrot.lane.b32.xlu0 %v947, 64
        %v1003 = vpop.permute.xlu0 %1002
        %1004 = vrot.lane.b32.xlu0 %v951, 64
        %v1005 = vpop.permute.xlu0 %1004
        %1006 = vrot.lane.b32.xlu0 %v950, 64
        %v1007 = vpop.permute.xlu0 %1006
        %1038 = vrot.lane.b32.xlu0 %v680, 96
        %v1039 = vpop.permute.xlu0 %1038
        %1040 = vrot.lane.b32.xlu0 %v682, 96
        %v1041 = vpop.permute.xlu0 %1040
        %1042 = vrot.lane.b32.xlu0 %v685, 96
        %v1043 = vpop.permute.xlu0 %1042
        %1044 = vrot.lane.b32.xlu0 %v687, 96
        %v1045 = vpop.permute.xlu0 %1044
        %1046 = vrot.lane.b32.xlu0 %v690, 96
        %v1047 = vpop.permute.xlu0 %1046
        %1048 = vrot.lane.b32.xlu0 %v692, 96
        %v1049 = vpop.permute.xlu0 %1048
        %1050 = vrot.lane.b32.xlu0 %v695, 96
        %v1051 = vpop.permute.xlu0 %1050
        %1052 = vrot.lane.b32.xlu0 %v697, 96
        %v1053 = vpop.permute.xlu0 %1052
        %1054 = vrot.lane.b32.xlu0 %v700, 96
        %v1055 = vpop.permute.xlu0 %1054
        %1056 = vrot.lane.b32.xlu0 %v702, 96
        %v1057 = vpop.permute.xlu0 %1056
        %1058 = vrot.lane.b32.xlu0 %v705, 96
        %v1059 = vpop.permute.xlu0 %1058
        %1060 = vrot.lane.b32.xlu0 %v707, 96
        %v1061 = vpop.permute.xlu0 %1060
        %1062 = vrot.lane.b32.xlu0 %v710, 96
        %v1063 = vpop.permute.xlu0 %1062
        %1064 = vrot.lane.b32.xlu0 %v712, 96
        %v1065 = vpop.permute.xlu0 %1064
        %1066 = vrot.lane.b32.xlu0 %v715, 96
        %v1067 = vpop.permute.xlu0 %1066
        %1068 = vrot.lane.b32.xlu0 %v717, 96
        %v1069 = vpop.permute.xlu0 %1068
        %1070 = vrot.lane.b32.xlu0 %v720, 96
        %v1071 = vpop.permute.xlu0 %1070
        %1072 = vrot.lane.b32.xlu0 %v722, 96
        %v1073 = vpop.permute.xlu0 %1072
        %1074 = vrot.lane.b32.xlu0 %v725, 96
        %v1075 = vpop.permute.xlu0 %1074
        %1076 = vrot.lane.b32.xlu0 %v727, 96
        %v1077 = vpop.permute.xlu0 %1076
        %1078 = vrot.lane.b32.xlu0 %v730, 96
        %v1079 = vpop.permute.xlu0 %1078
        %1080 = vrot.lane.b32.xlu0 %v732, 96
        %v1081 = vpop.permute.xlu0 %1080
        %1082 = vrot.lane.b32.xlu0 %v735, 96
        %v1083 = vpop.permute.xlu0 %1082
        %1084 = vrot.lane.b32.xlu0 %v737, 96
        %v1085 = vpop.permute.xlu0 %1084
        %1086 = vrot.lane.b32.xlu0 %v740, 96
        %v1087 = vpop.permute.xlu0 %1086
        %1088 = vrot.lane.b32.xlu0 %v742, 96
        %v1089 = vpop.permute.xlu0 %1088
        %1090 = vrot.lane.b32.xlu0 %v745, 96
        %v1091 = vpop.permute.xlu0 %1090
        %1092 = vrot.lane.b32.xlu0 %v747, 96
        %v1093 = vpop.permute.xlu0 %1092
        %v1122 = vrot.slane %v745, 1
        %v1123 = vrot.slane %v747, 1
        %v1124 = vsel %vm782, %v1122, %v1123
        %v1153 = vrot.slane %v745, 2
        %v1154 = vrot.slane %v747, 2
        %v1155 = vsel %vm909, %v1153, %v1154
        %1156 = vrot.lane.b32.xlu0 %v915, 32
        %v1157 = vpop.permute.xlu0 %1156
        %1158 = vrot.lane.b32.xlu0 %v914, 32
        %v1159 = vpop.permute.xlu0 %1158
        %1160 = vrot.lane.b32.xlu0 %v918, 32
        %v1161 = vpop.permute.xlu0 %1160
        %1162 = vrot.lane.b32.xlu0 %v917, 32
        %v1163 = vpop.permute.xlu0 %1162
        %1164 = vrot.lane.b32.xlu0 %v921, 32
        %v1165 = vpop.permute.xlu0 %1164
        %1166 = vrot.lane.b32.xlu0 %v920, 32
        %v1167 = vpop.permute.xlu0 %1166
        %1168 = vrot.lane.b32.xlu0 %v924, 32
        %v1169 = vpop.permute.xlu0 %1168
        %1170 = vrot.lane.b32.xlu0 %v923, 32
        %v1171 = vpop.permute.xlu0 %1170
        %1172 = vrot.lane.b32.xlu0 %v927, 32
        %v1173 = vpop.permute.xlu0 %1172
        %1174 = vrot.lane.b32.xlu0 %v926, 32
        %v1175 = vpop.permute.xlu0 %1174
        %1176 = vrot.lane.b32.xlu0 %v930, 32
        %v1177 = vpop.permute.xlu0 %1176
        %1178 = vrot.lane.b32.xlu0 %v929, 32
        %v1179 = vpop.permute.xlu0 %1178
        %1180 = vrot.lane.b32.xlu0 %v933, 32
        %v1181 = vpop.permute.xlu0 %1180
        %1182 = vrot.lane.b32.xlu0 %v932, 32
        %v1183 = vpop.permute.xlu0 %1182
        %1184 = vrot.lane.b32.xlu0 %v936, 32
        %v1185 = vpop.permute.xlu0 %1184
        %1186 = vrot.lane.b32.xlu0 %v935, 32
        %v1187 = vpop.permute.xlu0 %1186
        %1188 = vrot.lane.b32.xlu0 %v939, 32
        %v1189 = vpop.permute.xlu0 %1188
        %1190 = vrot.lane.b32.xlu0 %v938, 32
        %v1191 = vpop.permute.xlu0 %1190
        %1192 = vrot.lane.b32.xlu0 %v942, 32
        %v1193 = vpop.permute.xlu0 %1192
        %1194 = vrot.lane.b32.xlu0 %v941, 32
        %v1195 = vpop.permute.xlu0 %1194
        %1196 = vrot.lane.b32.xlu0 %v945, 32
        %v1197 = vpop.permute.xlu0 %1196
        %1198 = vrot.lane.b32.xlu0 %v944, 32
        %v1199 = vpop.permute.xlu0 %1198
        %1200 = vrot.lane.b32.xlu0 %v948, 32
        %v1201 = vpop.permute.xlu0 %1200
        %1202 = vrot.lane.b32.xlu0 %v947, 32
        %v1203 = vpop.permute.xlu0 %1202
        %1204 = vrot.lane.b32.xlu0 %v951, 32
        %v1205 = vpop.permute.xlu0 %1204
        %1206 = vrot.lane.b32.xlu0 %v950, 32
        %v1207 = vpop.permute.xlu0 %1206
        %1208 = vrot.lane.b32.xlu0 %v1155, 32
        %v1209 = vpop.permute.xlu0 %1208
        %1210 = vrot.lane.b32.xlu0 %v1154, 32
        %v1211 = vpop.permute.xlu0 %1210
        %1242 = vrot.lane.b32.xlu0 %v685, 64
        %v1243 = vpop.permute.xlu0 %1242
        %1244 = vrot.lane.b32.xlu0 %v687, 64
        %v1245 = vpop.permute.xlu0 %1244
        %1246 = vrot.lane.b32.xlu0 %v690, 64
        %v1247 = vpop.permute.xlu0 %1246
        %1248 = vrot.lane.b32.xlu0 %v692, 64
        %v1249 = vpop.permute.xlu0 %1248
        %1250 = vrot.lane.b32.xlu0 %v695, 64
        %v1251 = vpop.permute.xlu0 %1250
        %1252 = vrot.lane.b32.xlu0 %v697, 64
        %v1253 = vpop.permute.xlu0 %1252
        %1254 = vrot.lane.b32.xlu0 %v700, 64
        %v1255 = vpop.permute.xlu0 %1254
        %1256 = vrot.lane.b32.xlu0 %v702, 64
        %v1257 = vpop.permute.xlu0 %1256
        %1258 = vrot.lane.b32.xlu0 %v705, 64
        %v1259 = vpop.permute.xlu0 %1258
        %1260 = vrot.lane.b32.xlu0 %v707, 64
        %v1261 = vpop.permute.xlu0 %1260
        %1262 = vrot.lane.b32.xlu0 %v710, 64
        %v1263 = vpop.permute.xlu0 %1262
        %1264 = vrot.lane.b32.xlu0 %v712, 64
        %v1265 = vpop.permute.xlu0 %1264
        %1266 = vrot.lane.b32.xlu0 %v715, 64
        %v1267 = vpop.permute.xlu0 %1266
        %1268 = vrot.lane.b32.xlu0 %v717, 64
        %v1269 = vpop.permute.xlu0 %1268
        %1270 = vrot.lane.b32.xlu0 %v720, 64
        %v1271 = vpop.permute.xlu0 %1270
        %1272 = vrot.lane.b32.xlu0 %v722, 64
        %v1273 = vpop.permute.xlu0 %1272
        %1274 = vrot.lane.b32.xlu0 %v725, 64
        %v1275 = vpop.permute.xlu0 %1274
        %1276 = vrot.lane.b32.xlu0 %v727, 64
        %v1277 = vpop.permute.xlu0 %1276
        %1278 = vrot.lane.b32.xlu0 %v730, 64
        %v1279 = vpop.permute.xlu0 %1278
        %1280 = vrot.lane.b32.xlu0 %v732, 64
        %v1281 = vpop.permute.xlu0 %1280
        %1282 = vrot.lane.b32.xlu0 %v735, 64
        %v1283 = vpop.permute.xlu0 %1282
        %1284 = vrot.lane.b32.xlu0 %v737, 64
        %v1285 = vpop.permute.xlu0 %1284
        %1286 = vrot.lane.b32.xlu0 %v740, 64
        %v1287 = vpop.permute.xlu0 %1286
        %1288 = vrot.lane.b32.xlu0 %v742, 64
        %v1289 = vpop.permute.xlu0 %1288
        %1290 = vrot.lane.b32.xlu0 %v745, 64
        %v1291 = vpop.permute.xlu0 %1290
        %1292 = vrot.lane.b32.xlu0 %v747, 64
        %v1293 = vpop.permute.xlu0 %1292
        %1294 = vrot.lane.b32.xlu0 %v750, 64
        %v1295 = vpop.permute.xlu0 %1294
        %1296 = vrot.lane.b32.xlu0 %v752, 64
        %v1297 = vpop.permute.xlu0 %1296
        %v1326 = vrot.slane %v750, 1
        %v1327 = vrot.slane %v752, 1
        %v1328 = vsel %vm782, %v1326, %v1327
        %1329 = vrot.lane.b32.xlu0 %v791, 96
        %v1330 = vpop.permute.xlu0 %1329
        %1331 = vrot.lane.b32.xlu0 %v790, 96
        %v1332 = vpop.permute.xlu0 %1331
        %1333 = vrot.lane.b32.xlu0 %v794, 96
        %v1334 = vpop.permute.xlu0 %1333
        %1335 = vrot.lane.b32.xlu0 %v793, 96
        %v1336 = vpop.permute.xlu0 %1335
        %1337 = vrot.lane.b32.xlu0 %v797, 96
        %v1338 = vpop.permute.xlu0 %1337
        %1339 = vrot.lane.b32.xlu0 %v796, 96
        %v1340 = vpop.permute.xlu0 %1339
        %1341 = vrot.lane.b32.xlu0 %v800, 96
        %v1342 = vpop.permute.xlu0 %1341
        %1343 = vrot.lane.b32.xlu0 %v799, 96
        %v1344 = vpop.permute.xlu0 %1343
        %1345 = vrot.lane.b32.xlu0 %v803, 96
        %v1346 = vpop.permute.xlu0 %1345
        %1347 = vrot.lane.b32.xlu0 %v802, 96
        %v1348 = vpop.permute.xlu0 %1347
        %1349 = vrot.lane.b32.xlu0 %v806, 96
        %v1350 = vpop.permute.xlu0 %1349
        %1351 = vrot.lane.b32.xlu0 %v805, 96
        %v1352 = vpop.permute.xlu0 %1351
        %1353 = vrot.lane.b32.xlu0 %v809, 96
        %v1354 = vpop.permute.xlu0 %1353
        %1355 = vrot.lane.b32.xlu0 %v808, 96
        %v1356 = vpop.permute.xlu0 %1355
        %1357 = vrot.lane.b32.xlu0 %v812, 96
        %v1358 = vpop.permute.xlu0 %1357
        %1359 = vrot.lane.b32.xlu0 %v811, 96
        %v1360 = vpop.permute.xlu0 %1359
        %1361 = vrot.lane.b32.xlu0 %v815, 96
        %v1362 = vpop.permute.xlu0 %1361
        %1363 = vrot.lane.b32.xlu0 %v814, 96
        %v1364 = vpop.permute.xlu0 %1363
        %1365 = vrot.lane.b32.xlu0 %v818, 96
        %v1366 = vpop.permute.xlu0 %1365
        %1367 = vrot.lane.b32.xlu0 %v817, 96
        %v1368 = vpop.permute.xlu0 %1367
        %1369 = vrot.lane.b32.xlu0 %v821, 96
        %v1370 = vpop.permute.xlu0 %1369
        %1371 = vrot.lane.b32.xlu0 %v820, 96
        %v1372 = vpop.permute.xlu0 %1371
        %1373 = vrot.lane.b32.xlu0 %v824, 96
        %v1374 = vpop.permute.xlu0 %1373
        %1375 = vrot.lane.b32.xlu0 %v823, 96
        %v1376 = vpop.permute.xlu0 %1375
        %1377 = vrot.lane.b32.xlu0 %v1124, 96
        %v1378 = vpop.permute.xlu0 %1377
        %1379 = vrot.lane.b32.xlu0 %v1123, 96
        %v1380 = vpop.permute.xlu0 %1379
        %1381 = vrot.lane.b32.xlu0 %v1328, 96
        %v1382 = vpop.permute.xlu0 %1381
        %1383 = vrot.lane.b32.xlu0 %v1327, 96
        %v1384 = vpop.permute.xlu0 %1383
        %v1413 = vrot.slane %v750, 2
        %v1414 = vrot.slane %v752, 2
        %v1415 = vsel %vm909, %v1413, %v1414
        %vm1416 = vcmask 261120
        %v1417 = vsel %vm1416, %v675, %v826
        %v1418 = vsel %vm1416, %v677, %v828
        %v1419 = vsel %vm1416, %v680, %v830
        %v1420 = vsel %vm1416, %v682, %v832
        %v1421 = vsel %vm1416, %v685, %v834
        %v1422 = vsel %vm1416, %v687, %v836
        %v1423 = vsel %vm1416, %v690, %v838
        %v1424 = vsel %vm1416, %v692, %v840
        %v1425 = vsel %vm1416, %v695, %v842
        %v1426 = vsel %vm1416, %v697, %v844
        %v1427 = vsel %vm1416, %v700, %v846
        %v1428 = vsel %vm1416, %v702, %v848
        %v1429 = vsel %vm1416, %v705, %v850
        %v1430 = vsel %vm1416, %v707, %v852
        %v1431 = vsel %vm1416, %v710, %v854
        %v1432 = vsel %vm1416, %v712, %v856
        %v1433 = vsel %vm1416, %v715, %v858
        %v1434 = vsel %vm1416, %v717, %v860
        %v1435 = vsel %vm1416, %v720, %v862
        %v1436 = vsel %vm1416, %v722, %v864
        %v1437 = vsel %vm1416, %v725, %v866
        %v1438 = vsel %vm1416, %v727, %v868
        %v1439 = vsel %vm1416, %v730, %v870
        %v1440 = vsel %vm1416, %v732, %v872
        %v1441 = vsel %vm1416, %v735, %v874
        %v1442 = vsel %vm1416, %v737, %v876
        %v1443 = vsel %vm1416, %v740, %v878
        %v1444 = vsel %vm1416, %v742, %v880
        %vm1445 = vcmask 523264
        %v1446 = vsel %vm1445, %v1417, %v953
        %v1447 = vsel %vm1445, %v1418, %v955
        %v1448 = vsel %vm1445, %v1419, %v957
        %v1449 = vsel %vm1445, %v1420, %v959
        %v1450 = vsel %vm1445, %v1421, %v961
        %v1451 = vsel %vm1445, %v1422, %v963
        %v1452 = vsel %vm1445, %v1423, %v965
        %v1453 = vsel %vm1445, %v1424, %v967
        %v1454 = vsel %vm1445, %v1425, %v969
        %v1455 = vsel %vm1445, %v1426, %v971
        %v1456 = vsel %vm1445, %v1427, %v973
        %v1457 = vsel %vm1445, %v1428, %v975
        %v1458 = vsel %vm1445, %v1429, %v977
        %v1459 = vsel %vm1445, %v1430, %v979
        %v1460 = vsel %vm1445, %v1431, %v981
        %v1461 = vsel %vm1445, %v1432, %v983
        %v1462 = vsel %vm1445, %v1433, %v985
        %v1463 = vsel %vm1445, %v1434, %v987
        %v1464 = vsel %vm1445, %v1435, %v989
        %v1465 = vsel %vm1445, %v1436, %v991
        %v1466 = vsel %vm1445, %v1437, %v993
        %v1467 = vsel %vm1445, %v1438, %v995
        %v1468 = vsel %vm1445, %v1439, %v997
        %v1469 = vsel %vm1445, %v1440, %v999
        %v1470 = vsel %vm1445, %v1441, %v1001
        %v1471 = vsel %vm1445, %v1442, %v1003
        %v1472 = vsel %vm1445, %v1443, %v1005
        %v1473 = vsel %vm1445, %v1444, %v1007
        %vm1474 = vcmask 785408
        %v1475 = vsel %vm1474, %v1446, %v1039
        %v1476 = vsel %vm1474, %v1447, %v1041
        %v1477 = vsel %vm1474, %v1448, %v1043
        %v1478 = vsel %vm1474, %v1449, %v1045
        %v1479 = vsel %vm1474, %v1450, %v1047
        %v1480 = vsel %vm1474, %v1451, %v1049
        %v1481 = vsel %vm1474, %v1452, %v1051
        %v1482 = vsel %vm1474, %v1453, %v1053
        %v1483 = vsel %vm1474, %v1454, %v1055
        %v1484 = vsel %vm1474, %v1455, %v1057
        %v1485 = vsel %vm1474, %v1456, %v1059
        %v1486 = vsel %vm1474, %v1457, %v1061
        %v1487 = vsel %vm1474, %v1458, %v1063
        %v1488 = vsel %vm1474, %v1459, %v1065
        %v1489 = vsel %vm1474, %v1460, %v1067
        %v1490 = vsel %vm1474, %v1461, %v1069
        %v1491 = vsel %vm1474, %v1462, %v1071
        %v1492 = vsel %vm1474, %v1463, %v1073
        %v1493 = vsel %vm1474, %v1464, %v1075
        %v1494 = vsel %vm1474, %v1465, %v1077
        %v1495 = vsel %vm1474, %v1466, %v1079
        %v1496 = vsel %vm1474, %v1467, %v1081
        %v1497 = vsel %vm1474, %v1468, %v1083
        %v1498 = vsel %vm1474, %v1469, %v1085
        %v1499 = vsel %vm1474, %v1470, %v1087
        %v1500 = vsel %vm1474, %v1471, %v1089
        %v1501 = vsel %vm1474, %v1472, %v1091
        %v1502 = vsel %vm1474, %v1473, %v1093
        %v1503 = vsel %vm1416, %v788, %v1157
        %v1504 = vsel %vm1416, %v787, %v1159
        %v1505 = vsel %vm1416, %v791, %v1161
        %v1506 = vsel %vm1416, %v790, %v1163
        %v1507 = vsel %vm1416, %v794, %v1165
        %v1508 = vsel %vm1416, %v793, %v1167
        %v1509 = vsel %vm1416, %v797, %v1169
        %v1510 = vsel %vm1416, %v796, %v1171
        %v1511 = vsel %vm1416, %v800, %v1173
        %v1512 = vsel %vm1416, %v799, %v1175
        %v1513 = vsel %vm1416, %v803, %v1177
        %v1514 = vsel %vm1416, %v802, %v1179
        %v1515 = vsel %vm1416, %v806, %v1181
        %v1516 = vsel %vm1416, %v805, %v1183
        %v1517 = vsel %vm1416, %v809, %v1185
        %v1518 = vsel %vm1416, %v808, %v1187
        %v1519 = vsel %vm1416, %v812, %v1189
        %v1520 = vsel %vm1416, %v811, %v1191
        %v1521 = vsel %vm1416, %v815, %v1193
        %v1522 = vsel %vm1416, %v814, %v1195
        %v1523 = vsel %vm1416, %v818, %v1197
        %v1524 = vsel %vm1416, %v817, %v1199
        %v1525 = vsel %vm1416, %v821, %v1201
        %v1526 = vsel %vm1416, %v820, %v1203
        %v1527 = vsel %vm1416, %v824, %v1205
        %v1528 = vsel %vm1416, %v823, %v1207
        %v1529 = vsel %vm1416, %v1124, %v1209
        %v1530 = vsel %vm1416, %v1123, %v1211
        %v1531 = vsel %vm1445, %v1503, %v1243
        %v1532 = vsel %vm1445, %v1504, %v1245
        %v1533 = vsel %vm1445, %v1505, %v1247
        %v1534 = vsel %vm1445, %v1506, %v1249
        %v1535 = vsel %vm1445, %v1507, %v1251
        %v1536 = vsel %vm1445, %v1508, %v1253
        %v1537 = vsel %vm1445, %v1509, %v1255
        %v1538 = vsel %vm1445, %v1510, %v1257
        %v1539 = vsel %vm1445, %v1511, %v1259
        %v1540 = vsel %vm1445, %v1512, %v1261
        %v1541 = vsel %vm1445, %v1513, %v1263
        %v1542 = vsel %vm1445, %v1514, %v1265
        %v1543 = vsel %vm1445, %v1515, %v1267
        %v1544 = vsel %vm1445, %v1516, %v1269
        %v1545 = vsel %vm1445, %v1517, %v1271
        %v1546 = vsel %vm1445, %v1518, %v1273
        %v1547 = vsel %vm1445, %v1519, %v1275
        %v1548 = vsel %vm1445, %v1520, %v1277
        %v1549 = vsel %vm1445, %v1521, %v1279
        %v1550 = vsel %vm1445, %v1522, %v1281
        %v1551 = vsel %vm1445, %v1523, %v1283
        %v1552 = vsel %vm1445, %v1524, %v1285
        %v1553 = vsel %vm1445, %v1525, %v1287
        %v1554 = vsel %vm1445, %v1526, %v1289
        %v1555 = vsel %vm1445, %v1527, %v1291
        %v1556 = vsel %vm1445, %v1528, %v1293
        %v1557 = vsel %vm1445, %v1529, %v1295
        %v1558 = vsel %vm1445, %v1530, %v1297
        %v1559 = vsel %vm1474, %v1531, %v1330
        %v1560 = vsel %vm1474, %v1532, %v1332
        %v1561 = vsel %vm1474, %v1533, %v1334
        %v1562 = vsel %vm1474, %v1534, %v1336
        %v1563 = vsel %vm1474, %v1535, %v1338
        %v1564 = vsel %vm1474, %v1536, %v1340
        %v1565 = vsel %vm1474, %v1537, %v1342
        %v1566 = vsel %vm1474, %v1538, %v1344
        %v1567 = vsel %vm1474, %v1539, %v1346
        %v1568 = vsel %vm1474, %v1540, %v1348
        %v1569 = vsel %vm1474, %v1541, %v1350
        %v1570 = vsel %vm1474, %v1542, %v1352
        %v1571 = vsel %vm1474, %v1543, %v1354
        %v1572 = vsel %vm1474, %v1544, %v1356
        %v1573 = vsel %vm1474, %v1545, %v1358
        %v1574 = vsel %vm1474, %v1546, %v1360
        %v1575 = vsel %vm1474, %v1547, %v1362
        %v1576 = vsel %vm1474, %v1548, %v1364
        %v1577 = vsel %vm1474, %v1549, %v1366
        %v1578 = vsel %vm1474, %v1550, %v1368
        %v1579 = vsel %vm1474, %v1551, %v1370
        %v1580 = vsel %vm1474, %v1552, %v1372
        %v1581 = vsel %vm1474, %v1553, %v1374
        %v1582 = vsel %vm1474, %v1554, %v1376
        %v1583 = vsel %vm1474, %v1555, %v1378
        %v1584 = vsel %vm1474, %v1556, %v1380
        %v1585 = vsel %vm1474, %v1557, %v1382
        %v1586 = vsel %vm1474, %v1558, %v1384
        %v1643 = vrot.slane %v1559, 6
        %v1644 = vrot.slane %v918, 4
        %v1645 = vrot.slane %v1560, 6
        %v1646 = vrot.slane %v917, 4
        %v1647 = vrot.slane %v1561, 6
        %v1648 = vrot.slane %v921, 4
        %v1649 = vrot.slane %v1562, 6
        %v1650 = vrot.slane %v920, 4
        %v1651 = vrot.slane %v1563, 6
        %v1652 = vrot.slane %v924, 4
        %v1653 = vrot.slane %v1564, 6
        %v1654 = vrot.slane %v923, 4
        %v1655 = vrot.slane %v1565, 6
        %v1656 = vrot.slane %v927, 4
        %v1657 = vrot.slane %v1566, 6
        %v1658 = vrot.slane %v926, 4
        %v1659 = vrot.slane %v1567, 6
        %v1660 = vrot.slane %v930, 4
        %v1661 = vrot.slane %v1568, 6
        %v1662 = vrot.slane %v929, 4
        %v1663 = vrot.slane %v1569, 6
        %v1664 = vrot.slane %v933, 4
        %v1665 = vrot.slane %v1570, 6
        %v1666 = vrot.slane %v932, 4
        %v1667 = vrot.slane %v1571, 6
        %v1668 = vrot.slane %v936, 4
        %v1669 = vrot.slane %v1572, 6
        %v1670 = vrot.slane %v935, 4
        %v1671 = vrot.slane %v1573, 6
        %v1672 = vrot.slane %v939, 4
        %v1673 = vrot.slane %v1574, 6
        %v1674 = vrot.slane %v938, 4
        %v1675 = vrot.slane %v1575, 6
        %v1676 = vrot.slane %v942, 4
        %v1677 = vrot.slane %v1576, 6
        %v1678 = vrot.slane %v941, 4
        %v1679 = vrot.slane %v1577, 6
        %v1680 = vrot.slane %v945, 4
        %v1681 = vrot.slane %v1578, 6
        %v1682 = vrot.slane %v944, 4
        %v1683 = vrot.slane %v1579, 6
        %v1684 = vrot.slane %v948, 4
        %v1685 = vrot.slane %v1580, 6
        %v1686 = vrot.slane %v947, 4
        %v1687 = vrot.slane %v1581, 6
        %v1688 = vrot.slane %v951, 4
        %v1689 = vrot.slane %v1582, 6
        %v1690 = vrot.slane %v950, 4
        %v1691 = vrot.slane %v1583, 6
        %v1692 = vrot.slane %v1155, 4
        %v1693 = vrot.slane %v1584, 6
        %v1694 = vrot.slane %v1154, 4
        %v1695 = vrot.slane %v1585, 6
        %v1696 = vrot.slane %v1415, 4
        %v1697 = vrot.slane %v1586, 6
        %v1698 = vrot.slane %v1414, 4
        %vm1699 = vcmask 1041408
        %v1700 = vsel %vm1699, %v1475, %v1643
        %vm1701 = vcmask 1043456
        %v1702 = vsel %vm1701, %v1700, %v1644
        %vm1703 = vcmask 1043458
        %v1704 = vsel %vm1703, %v1475, %v1643
        %vm1705 = vcmask 1045506
        %v1706 = vsel %vm1705, %v1704, %v1644
        %v1707 = vrot.slane %v1706, 2
        %vm1708 = vcmask 1045508
        %v1709 = vsel %vm1708, %v1475, %v1643
        %v1710 = vsel %vm1701, %v1644, %v1709
        %v1711 = vrot.slane %v1710, 4
        %v1712 = vsel %vm909, %v1643, %v1475
        %v1713 = vsel %vm1705, %v1644, %v1712
        %v1714 = vrot.slane %v1713, 6
        %v1715 = vsel %vm1699, %v1476, %v1645
        %v1716 = vsel %vm1701, %v1715, %v1646
        %v1717 = vsel %vm1703, %v1476, %v1645
        %v1718 = vsel %vm1705, %v1717, %v1646
        %v1719 = vrot.slane %v1718, 2
        %v1720 = vsel %vm1708, %v1476, %v1645
        %v1721 = vsel %vm1701, %v1646, %v1720
        %v1722 = vrot.slane %v1721, 4
        %v1723 = vsel %vm1699, %v1477, %v1647
        %v1724 = vsel %vm1701, %v1723, %v1648
        %v1725 = vsel %vm1703, %v1477, %v1647
        %v1726 = vsel %vm1705, %v1725, %v1648
        %v1727 = vrot.slane %v1726, 2
        %v1728 = vsel %vm1708, %v1477, %v1647
        %v1729 = vsel %vm1701, %v1648, %v1728
        %v1730 = vrot.slane %v1729, 4
        %v1731 = vsel %vm909, %v1647, %v1477
        %v1732 = vsel %vm1705, %v1648, %v1731
        %v1733 = vrot.slane %v1732, 6
        %v1734 = vsel %vm1699, %v1478, %v1649
        %v1735 = vsel %vm1701, %v1734, %v1650
        %v1736 = vsel %vm1703, %v1478, %v1649
        %v1737 = vsel %vm1705, %v1736, %v1650
        %v1738 = vrot.slane %v1737, 2
        %v1739 = vsel %vm1708, %v1478, %v1649
        %v1740 = vsel %vm1701, %v1650, %v1739
        %v1741 = vrot.slane %v1740, 4
        %v1742 = vsel %vm1699, %v1479, %v1651
        %v1743 = vsel %vm1701, %v1742, %v1652
        %v1744 = vsel %vm1703, %v1479, %v1651
        %v1745 = vsel %vm1705, %v1744, %v1652
        %v1746 = vrot.slane %v1745, 2
        %v1747 = vsel %vm1708, %v1479, %v1651
        %v1748 = vsel %vm1701, %v1652, %v1747
        %v1749 = vrot.slane %v1748, 4
        %v1750 = vsel %vm909, %v1651, %v1479
        %v1751 = vsel %vm1705, %v1652, %v1750
        %v1752 = vrot.slane %v1751, 6
        %v1753 = vsel %vm1699, %v1480, %v1653
        %v1754 = vsel %vm1701, %v1753, %v1654
        %v1755 = vsel %vm1703, %v1480, %v1653
        %v1756 = vsel %vm1705, %v1755, %v1654
        %v1757 = vrot.slane %v1756, 2
        %v1758 = vsel %vm1708, %v1480, %v1653
        %v1759 = vsel %vm1701, %v1654, %v1758
        %v1760 = vrot.slane %v1759, 4
        %v1761 = vsel %vm1699, %v1481, %v1655
        %v1762 = vsel %vm1701, %v1761, %v1656
        %v1763 = vsel %vm1703, %v1481, %v1655
        %v1764 = vsel %vm1705, %v1763, %v1656
        %v1765 = vrot.slane %v1764, 2
        %v1766 = vsel %vm1708, %v1481, %v1655
        %v1767 = vsel %vm1701, %v1656, %v1766
        %v1768 = vrot.slane %v1767, 4
        %v1769 = vsel %vm909, %v1655, %v1481
        %v1770 = vsel %vm1705, %v1656, %v1769
        %v1771 = vrot.slane %v1770, 6
        %v1772 = vsel %vm1699, %v1482, %v1657
        %v1773 = vsel %vm1701, %v1772, %v1658
        %v1774 = vsel %vm1703, %v1482, %v1657
        %v1775 = vsel %vm1705, %v1774, %v1658
        %v1776 = vrot.slane %v1775, 2
        %v1777 = vsel %vm1708, %v1482, %v1657
        %v1778 = vsel %vm1701, %v1658, %v1777
        %v1779 = vrot.slane %v1778, 4
        %v1780 = vsel %vm1699, %v1483, %v1659
        %v1781 = vsel %vm1701, %v1780, %v1660
        %v1782 = vsel %vm1703, %v1483, %v1659
        %v1783 = vsel %vm1705, %v1782, %v1660
        %v1784 = vrot.slane %v1783, 2
        %v1785 = vsel %vm1708, %v1483, %v1659
        %v1786 = vsel %vm1701, %v1660, %v1785
        %v1787 = vrot.slane %v1786, 4
        %v1788 = vsel %vm909, %v1659, %v1483
        %v1789 = vsel %vm1705, %v1660, %v1788
        %v1790 = vrot.slane %v1789, 6
        %v1791 = vsel %vm1699, %v1484, %v1661
        %v1792 = vsel %vm1701, %v1791, %v1662
        %v1793 = vsel %vm1703, %v1484, %v1661
        %v1794 = vsel %vm1705, %v1793, %v1662
        %v1795 = vrot.slane %v1794, 2
        %v1796 = vsel %vm1708, %v1484, %v1661
        %v1797 = vsel %vm1701, %v1662, %v1796
        %v1798 = vrot.slane %v1797, 4
        %v1799 = vsel %vm1699, %v1485, %v1663
        %v1800 = vsel %vm1701, %v1799, %v1664
        %v1801 = vsel %vm1703, %v1485, %v1663
        %v1802 = vsel %vm1705, %v1801, %v1664
        %v1803 = vrot.slane %v1802, 2
        %v1804 = vsel %vm1708, %v1485, %v1663
        %v1805 = vsel %vm1701, %v1664, %v1804
        %v1806 = vrot.slane %v1805, 4
        %v1807 = vsel %vm909, %v1663, %v1485
        %v1808 = vsel %vm1705, %v1664, %v1807
        %v1809 = vrot.slane %v1808, 6
        %v1810 = vsel %vm1699, %v1486, %v1665
        %v1811 = vsel %vm1701, %v1810, %v1666
        %v1812 = vsel %vm1703, %v1486, %v1665
        %v1813 = vsel %vm1705, %v1812, %v1666
        %v1814 = vrot.slane %v1813, 2
        %v1815 = vsel %vm1708, %v1486, %v1665
        %v1816 = vsel %vm1701, %v1666, %v1815
        %v1817 = vrot.slane %v1816, 4
        %v1818 = vsel %vm1699, %v1487, %v1667
        %v1819 = vsel %vm1701, %v1818, %v1668
        %v1820 = vsel %vm1703, %v1487, %v1667
        %v1821 = vsel %vm1705, %v1820, %v1668
        %v1822 = vrot.slane %v1821, 2
        %v1823 = vsel %vm1708, %v1487, %v1667
        %v1824 = vsel %vm1701, %v1668, %v1823
        %v1825 = vrot.slane %v1824, 4
        %v1826 = vsel %vm909, %v1667, %v1487
        %v1827 = vsel %vm1705, %v1668, %v1826
        %v1828 = vrot.slane %v1827, 6
        %v1829 = vsel %vm1699, %v1488, %v1669
        %v1830 = vsel %vm1701, %v1829, %v1670
        %v1831 = vsel %vm1703, %v1488, %v1669
        %v1832 = vsel %vm1705, %v1831, %v1670
        %v1833 = vrot.slane %v1832, 2
        %v1834 = vsel %vm1708, %v1488, %v1669
        %v1835 = vsel %vm1701, %v1670, %v1834
        %v1836 = vrot.slane %v1835, 4
        %v1837 = vsel %vm1699, %v1489, %v1671
        %v1838 = vsel %vm1701, %v1837, %v1672
        %v1839 = vsel %vm1703, %v1489, %v1671
        %v1840 = vsel %vm1705, %v1839, %v1672
        %v1841 = vrot.slane %v1840, 2
        %v1842 = vsel %vm1708, %v1489, %v1671
        %v1843 = vsel %vm1701, %v1672, %v1842
        %v1844 = vrot.slane %v1843, 4
        %v1845 = vsel %vm909, %v1671, %v1489
        %v1846 = vsel %vm1705, %v1672, %v1845
        %v1847 = vrot.slane %v1846, 6
        %v1848 = vsel %vm1699, %v1490, %v1673
        %v1849 = vsel %vm1701, %v1848, %v1674
        %v1850 = vsel %vm1703, %v1490, %v1673
        %v1851 = vsel %vm1705, %v1850, %v1674
        %v1852 = vrot.slane %v1851, 2
        %v1853 = vsel %vm1708, %v1490, %v1673
        %v1854 = vsel %vm1701, %v1674, %v1853
        %v1855 = vrot.slane %v1854, 4
        %v1856 = vsel %vm1699, %v1491, %v1675
        %v1857 = vsel %vm1701, %v1856, %v1676
        %v1858 = vsel %vm1703, %v1491, %v1675
        %v1859 = vsel %vm1705, %v1858, %v1676
        %v1860 = vrot.slane %v1859, 2
        %v1861 = vsel %vm1708, %v1491, %v1675
        %v1862 = vsel %vm1701, %v1676, %v1861
        %v1863 = vrot.slane %v1862, 4
        %v1864 = vsel %vm909, %v1675, %v1491
        %v1865 = vsel %vm1705, %v1676, %v1864
        %v1866 = vrot.slane %v1865, 6
        %v1867 = vsel %vm1699, %v1492, %v1677
        %v1868 = vsel %vm1701, %v1867, %v1678
        %v1869 = vsel %vm1703, %v1492, %v1677
        %v1870 = vsel %vm1705, %v1869, %v1678
        %v1871 = vrot.slane %v1870, 2
        %v1872 = vsel %vm1708, %v1492, %v1677
        %v1873 = vsel %vm1701, %v1678, %v1872
        %v1874 = vrot.slane %v1873, 4
        %v1875 = vsel %vm1699, %v1493, %v1679
        %v1876 = vsel %vm1701, %v1875, %v1680
        %v1877 = vsel %vm1703, %v1493, %v1679
        %v1878 = vsel %vm1705, %v1877, %v1680
        %v1879 = vrot.slane %v1878, 2
        %v1880 = vsel %vm1708, %v1493, %v1679
        %v1881 = vsel %vm1701, %v1680, %v1880
        %v1882 = vrot.slane %v1881, 4
        %v1883 = vsel %vm909, %v1679, %v1493
        %v1884 = vsel %vm1705, %v1680, %v1883
        %v1885 = vrot.slane %v1884, 6
        %v1886 = vsel %vm1699, %v1494, %v1681
        %v1887 = vsel %vm1701, %v1886, %v1682
        %v1888 = vsel %vm1703, %v1494, %v1681
        %v1889 = vsel %vm1705, %v1888, %v1682
        %v1890 = vrot.slane %v1889, 2
        %v1891 = vsel %vm1708, %v1494, %v1681
        %v1892 = vsel %vm1701, %v1682, %v1891
        %v1893 = vrot.slane %v1892, 4
        %v1894 = vsel %vm1699, %v1495, %v1683
        %v1895 = vsel %vm1701, %v1894, %v1684
        %v1896 = vsel %vm1703, %v1495, %v1683
        %v1897 = vsel %vm1705, %v1896, %v1684
        %v1898 = vrot.slane %v1897, 2
        %v1899 = vsel %vm1708, %v1495, %v1683
        %v1900 = vsel %vm1701, %v1684, %v1899
        %v1901 = vrot.slane %v1900, 4
        %v1902 = vsel %vm909, %v1683, %v1495
        %v1903 = vsel %vm1705, %v1684, %v1902
        %v1904 = vrot.slane %v1903, 6
        %v1905 = vsel %vm1699, %v1496, %v1685
        %v1906 = vsel %vm1701, %v1905, %v1686
        %v1907 = vsel %vm1703, %v1496, %v1685
        %v1908 = vsel %vm1705, %v1907, %v1686
        %v1909 = vrot.slane %v1908, 2
        %v1910 = vsel %vm1708, %v1496, %v1685
        %v1911 = vsel %vm1701, %v1686, %v1910
        %v1912 = vrot.slane %v1911, 4
        %v1913 = vsel %vm1699, %v1497, %v1687
        %v1914 = vsel %vm1701, %v1913, %v1688
        %v1915 = vsel %vm1703, %v1497, %v1687
        %v1916 = vsel %vm1705, %v1915, %v1688
        %v1917 = vrot.slane %v1916, 2
        %v1918 = vsel %vm1708, %v1497, %v1687
        %v1919 = vsel %vm1701, %v1688, %v1918
        %v1920 = vrot.slane %v1919, 4
        %v1921 = vsel %vm909, %v1687, %v1497
        %v1922 = vsel %vm1705, %v1688, %v1921
        %v1923 = vrot.slane %v1922, 6
        %v1924 = vsel %vm1699, %v1498, %v1689
        %v1925 = vsel %vm1701, %v1924, %v1690
        %v1926 = vsel %vm1703, %v1498, %v1689
        %v1927 = vsel %vm1705, %v1926, %v1690
        %v1928 = vrot.slane %v1927, 2
        %v1929 = vsel %vm1708, %v1498, %v1689
        %v1930 = vsel %vm1701, %v1690, %v1929
        %v1931 = vrot.slane %v1930, 4
        %v1932 = vsel %vm1699, %v1499, %v1691
        %v1933 = vsel %vm1701, %v1932, %v1692
        %v1934 = vsel %vm1703, %v1499, %v1691
        %v1935 = vsel %vm1705, %v1934, %v1692
        %v1936 = vrot.slane %v1935, 2
        %v1937 = vsel %vm1708, %v1499, %v1691
        %v1938 = vsel %vm1701, %v1692, %v1937
        %v1939 = vrot.slane %v1938, 4
        %v1940 = vsel %vm909, %v1691, %v1499
        %v1941 = vsel %vm1705, %v1692, %v1940
        %v1942 = vrot.slane %v1941, 6
        %v1943 = vsel %vm1699, %v1500, %v1693
        %v1944 = vsel %vm1701, %v1943, %v1694
        %v1945 = vsel %vm1703, %v1500, %v1693
        %v1946 = vsel %vm1705, %v1945, %v1694
        %v1947 = vrot.slane %v1946, 2
        %v1948 = vsel %vm1708, %v1500, %v1693
        %v1949 = vsel %vm1701, %v1694, %v1948
        %v1950 = vrot.slane %v1949, 4
        %v1951 = vsel %vm1699, %v1501, %v1695
        %v1952 = vsel %vm1701, %v1951, %v1696
        %v1953 = vsel %vm1703, %v1501, %v1695
        %v1954 = vsel %vm1705, %v1953, %v1696
        %v1955 = vrot.slane %v1954, 2
        %v1956 = vsel %vm1708, %v1501, %v1695
        %v1957 = vsel %vm1701, %v1696, %v1956
        %v1958 = vrot.slane %v1957, 4
        %v1959 = vsel %vm909, %v1695, %v1501
        %v1960 = vsel %vm1705, %v1696, %v1959
        %v1961 = vrot.slane %v1960, 6
        %v1962 = vsel %vm1699, %v1502, %v1697
        %v1963 = vsel %vm1701, %v1962, %v1698
        %v1964 = vsel %vm1703, %v1502, %v1697
        %v1965 = vsel %vm1705, %v1964, %v1698
        %v1966 = vrot.slane %v1965, 2
        %v1967 = vsel %vm1708, %v1502, %v1697
        %v1968 = vsel %vm1701, %v1698, %v1967
        %v1969 = vrot.slane %v1968, 4
        %1970 = vst [vmem:[#allocation1] ss:$4 sm:$0xff] %v1702
        %s1971 = scalar_lea.vmem [#allocation1], 1
        %1972 = vst [vmem:[%s1971] ss:$4 sm:$0xff] %v1707
        %s1973 = scalar_lea.vmem [#allocation1], 2
        %1974 = vst [vmem:[%s1973] ss:$4 sm:$0xff] %v1711
        %s1975 = scalar_lea.vmem [#allocation1], 3
        %1976 = vst [vmem:[%s1975] ss:$4 sm:$0xff] %v1714
        %s1977 = scalar_lea.vmem [#allocation1], 32
        %1978 = vst [vmem:[%s1977] ss:$4 sm:$0xff] %v1716
        %s1979 = scalar_lea.vmem [#allocation1], 33
        %1980 = vst [vmem:[%s1979] ss:$4 sm:$0xff] %v1719
        %s1981 = scalar_lea.vmem [#allocation1], 34
        %1982 = vst [vmem:[%s1981] ss:$4 sm:$0xff] %v1722
        %s1983 = scalar_lea.vmem [#allocation1], 35
        %1984 = vst [vmem:[%s1983] ss:$4 sm:$0xff] %v1724
        %v1985 = vld.sshfl [vmem:[#allocation1] sm:$0xff pattern:$0x73625140]
        %v1986 = vld.sshfl [vmem:[#allocation1 + $0x8] sm:$0xff pattern:$0x73625140]
        %v1987 = vld.sshfl [vmem:[#allocation1 + $0x10] sm:$0xff pattern:$0x73625140]
        %v1988 = vld.sshfl [vmem:[#allocation1 + $0x20] sm:$0xff pattern:$0x73625140]
        %v1989 = vld.sshfl [vmem:[#allocation1 + $0x28] sm:$0xff pattern:$0x73625140]
        %v1990 = vld.sshfl [vmem:[#allocation1 + $0x30] sm:$0xff pattern:$0x73625140]
        %1991 = vst [vmem:[#allocation1] ss:$4 sm:$0xff] %v1727
        %1992 = vst [vmem:[%s1971] ss:$4 sm:$0xff] %v1730
        %1993 = vst [vmem:[%s1973] ss:$4 sm:$0xff] %v1733
        %1994 = vst [vmem:[%s1975] ss:$4 sm:$0xff] %v1735
        %1995 = vst [vmem:[%s1977] ss:$4 sm:$0xff] %v1738
        %1996 = vst [vmem:[%s1979] ss:$4 sm:$0xff] %v1741
        %1997 = vst [vmem:[%s1981] ss:$4 sm:$0xff] %v1743
        %1998 = vst [vmem:[%s1983] ss:$4 sm:$0xff] %v1746
        %v1999 = vld.sshfl [vmem:[#allocation1] sm:$0xff pattern:$0x73625140]
        %v2000 = vld.sshfl [vmem:[#allocation1 + $0x8] sm:$0xff pattern:$0x73625140]
        %v2001 = vld.sshfl [vmem:[#allocation1 + $0x10] sm:$0xff pattern:$0x73625140]
        %v2002 = vld.sshfl [vmem:[#allocation1 + $0x20] sm:$0xff pattern:$0x73625140]
        %v2003 = vld.sshfl [vmem:[#allocation1 + $0x28] sm:$0xff pattern:$0x73625140]
        %v2004 = vld.sshfl [vmem:[#allocation1 + $0x30] sm:$0xff pattern:$0x73625140]
        %2005 = vst [vmem:[#allocation1] ss:$4 sm:$0xff] %v1749
        %2006 = vst [vmem:[%s1971] ss:$4 sm:$0xff] %v1752
        %2007 = vst [vmem:[%s1973] ss:$4 sm:$0xff] %v1754
        %2008 = vst [vmem:[%s1975] ss:$4 sm:$0xff] %v1757
        %2009 = vst [vmem:[%s1977] ss:$4 sm:$0xff] %v1760
        %2010 = vst [vmem:[%s1979] ss:$4 sm:$0xff] %v1762
        %2011 = vst [vmem:[%s1981] ss:$4 sm:$0xff] %v1765
        %2012 = vst [vmem:[%s1983] ss:$4 sm:$0xff] %v1768
        %v2013 = vld.sshfl [vmem:[#allocation1] sm:$0xff pattern:$0x73625140]
        %v2014 = vld.sshfl [vmem:[#allocation1 + $0x8] sm:$0xff pattern:$0x73625140]
        %v2015 = vld.sshfl [vmem:[#allocation1 + $0x10] sm:$0xff pattern:$0x73625140]
        %v2016 = vld.sshfl [vmem:[#allocation1 + $0x20] sm:$0xff pattern:$0x73625140]
        %v2017 = vld.sshfl [vmem:[#allocation1 + $0x28] sm:$0xff pattern:$0x73625140]
        %v2018 = vld.sshfl [vmem:[#allocation1 + $0x30] sm:$0xff pattern:$0x73625140]
        %2019 = vst [vmem:[#allocation1] ss:$4 sm:$0xff] %v1771
        %2020 = vst [vmem:[%s1971] ss:$4 sm:$0xff] %v1773
        %2021 = vst [vmem:[%s1973] ss:$4 sm:$0xff] %v1776
        %2022 = vst [vmem:[%s1975] ss:$4 sm:$0xff] %v1779
        %2023 = vst [vmem:[%s1977] ss:$4 sm:$0xff] %v1781
        %2024 = vst [vmem:[%s1979] ss:$4 sm:$0xff] %v1784
        %2025 = vst [vmem:[%s1981] ss:$4 sm:$0xff] %v1787
        %2026 = vst [vmem:[%s1983] ss:$4 sm:$0xff] %v1790
        %v2027 = vld.sshfl [vmem:[#allocation1] sm:$0xff pattern:$0x73625140]
        %v2028 = vld.sshfl [vmem:[#allocation1 + $0x8] sm:$0xff pattern:$0x73625140]
        %v2029 = vld.sshfl [vmem:[#allocation1 + $0x10] sm:$0xff pattern:$0x73625140]
        %v2030 = vld.sshfl [vmem:[#allocation1 + $0x20] sm:$0xff pattern:$0x73625140]
        %v2031 = vld.sshfl [vmem:[#allocation1 + $0x28] sm:$0xff pattern:$0x73625140]
        %v2032 = vld.sshfl [vmem:[#allocation1 + $0x30] sm:$0xff pattern:$0x73625140]
        %2033 = vst [vmem:[#allocation1] ss:$4 sm:$0xff] %v1792
        %2034 = vst [vmem:[%s1971] ss:$4 sm:$0xff] %v1795
        %2035 = vst [vmem:[%s1973] ss:$4 sm:$0xff] %v1798
        %2036 = vst [vmem:[%s1975] ss:$4 sm:$0xff] %v1800
        %2037 = vst [vmem:[%s1977] ss:$4 sm:$0xff] %v1803
        %2038 = vst [vmem:[%s1979] ss:$4 sm:$0xff] %v1806
        %2039 = vst [vmem:[%s1981] ss:$4 sm:$0xff] %v1809
        %2040 = vst [vmem:[%s1983] ss:$4 sm:$0xff] %v1811
        %v2041 = vld.sshfl [vmem:[#allocation1] sm:$0xff pattern:$0x73625140]
        %v2042 = vld.sshfl [vmem:[#allocation1 + $0x8] sm:$0xff pattern:$0x73625140]
        %v2043 = vld.sshfl [vmem:[#allocation1 + $0x10] sm:$0xff pattern:$0x73625140]
        %v2044 = vld.sshfl [vmem:[#allocation1 + $0x20] sm:$0xff pattern:$0x73625140]
        %v2045 = vld.sshfl [vmem:[#allocation1 + $0x28] sm:$0xff pattern:$0x73625140]
        %v2046 = vld.sshfl [vmem:[#allocation1 + $0x30] sm:$0xff pattern:$0x73625140]
        %2047 = vst [vmem:[#allocation1] ss:$4 sm:$0xff] %v1814
        %2048 = vst [vmem:[%s1971] ss:$4 sm:$0xff] %v1817
        %2049 = vst [vmem:[%s1973] ss:$4 sm:$0xff] %v1819
        %2050 = vst [vmem:[%s1975] ss:$4 sm:$0xff] %v1822
        %2051 = vst [vmem:[%s1977] ss:$4 sm:$0xff] %v1825
        %2052 = vst [vmem:[%s1979] ss:$4 sm:$0xff] %v1828
        %2053 = vst [vmem:[%s1981] ss:$4 sm:$0xff] %v1830
        %2054 = vst [vmem:[%s1983] ss:$4 sm:$0xff] %v1833
        %v2055 = vld.sshfl [vmem:[#allocation1] sm:$0xff pattern:$0x73625140]
        %v2056 = vld.sshfl [vmem:[#allocation1 + $0x8] sm:$0xff pattern:$0x73625140]
        %v2057 = vld.sshfl [vmem:[#allocation1 + $0x10] sm:$0xff pattern:$0x73625140]
        %v2058 = vld.sshfl [vmem:[#allocation1 + $0x20] sm:$0xff pattern:$0x73625140]
        %v2059 = vld.sshfl [vmem:[#allocation1 + $0x28] sm:$0xff pattern:$0x73625140]
        %v2060 = vld.sshfl [vmem:[#allocation1 + $0x30] sm:$0xff pattern:$0x73625140]
        %2061 = vst [vmem:[#allocation1] ss:$4 sm:$0xff] %v1836
        %2062 = vst [vmem:[%s1971] ss:$4 sm:$0xff] %v1838
        %2063 = vst [vmem:[%s1973] ss:$4 sm:$0xff] %v1841
        %2064 = vst [vmem:[%s1975] ss:$4 sm:$0xff] %v1844
        %2065 = vst [vmem:[%s1977] ss:$4 sm:$0xff] %v1847
        %2066 = vst [vmem:[%s1979] ss:$4 sm:$0xff] %v1849
        %2067 = vst [vmem:[%s1981] ss:$4 sm:$0xff] %v1852
        %2068 = vst [vmem:[%s1983] ss:$4 sm:$0xff] %v1855
        %v2069 = vld.sshfl [vmem:[#allocation1] sm:$0xff pattern:$0x73625140]
        %v2070 = vld.sshfl [vmem:[#allocation1 + $0x8] sm:$0xff pattern:$0x73625140]
        %v2071 = vld.sshfl [vmem:[#allocation1 + $0x10] sm:$0xff pattern:$0x73625140]
        %v2072 = vld.sshfl [vmem:[#allocation1 + $0x20] sm:$0xff pattern:$0x73625140]
        %v2073 = vld.sshfl [vmem:[#allocation1 + $0x28] sm:$0xff pattern:$0x73625140]
        %v2074 = vld.sshfl [vmem:[#allocation1 + $0x30] sm:$0xff pattern:$0x73625140]
        %2075 = vst [vmem:[#allocation1] ss:$4 sm:$0xff] %v1857
        %2076 = vst [vmem:[%s1971] ss:$4 sm:$0xff] %v1860
        %2077 = vst [vmem:[%s1973] ss:$4 sm:$0xff] %v1863
        %2078 = vst [vmem:[%s1975] ss:$4 sm:$0xff] %v1866
        %2079 = vst [vmem:[%s1977] ss:$4 sm:$0xff] %v1868
        %2080 = vst [vmem:[%s1979] ss:$4 sm:$0xff] %v1871
        %2081 = vst [vmem:[%s1981] ss:$4 sm:$0xff] %v1874
        %2082 = vst [vmem:[%s1983] ss:$4 sm:$0xff] %v1876
        %v2083 = vld.sshfl [vmem:[#allocation1] sm:$0xff pattern:$0x73625140]
        %v2084 = vld.sshfl [vmem:[#allocation1 + $0x8] sm:$0xff pattern:$0x73625140]
        %v2085 = vld.sshfl [vmem:[#allocation1 + $0x10] sm:$0xff pattern:$0x73625140]
        %v2086 = vld.sshfl [vmem:[#allocation1 + $0x20] sm:$0xff pattern:$0x73625140]
        %v2087 = vld.sshfl [vmem:[#allocation1 + $0x28] sm:$0xff pattern:$0x73625140]
        %v2088 = vld.sshfl [vmem:[#allocation1 + $0x30] sm:$0xff pattern:$0x73625140]
        %2089 = vst [vmem:[#allocation1] ss:$4 sm:$0xff] %v1879
        %2090 = vst [vmem:[%s1971] ss:$4 sm:$0xff] %v1882
        %2091 = vst [vmem:[%s1973] ss:$4 sm:$0xff] %v1885
        %2092 = vst [vmem:[%s1975] ss:$4 sm:$0xff] %v1887
        %2093 = vst [vmem:[%s1977] ss:$4 sm:$0xff] %v1890
        %2094 = vst [vmem:[%s1979] ss:$4 sm:$0xff] %v1893
        %2095 = vst [vmem:[%s1981] ss:$4 sm:$0xff] %v1895
        %2096 = vst [vmem:[%s1983] ss:$4 sm:$0xff] %v1898
        %v2097 = vld.sshfl [vmem:[#allocation1] sm:$0xff pattern:$0x73625140]
        %v2098 = vld.sshfl [vmem:[#allocation1 + $0x8] sm:$0xff pattern:$0x73625140]
        %v2099 = vld.sshfl [vmem:[#allocation1 + $0x10] sm:$0xff pattern:$0x73625140]
        %v2100 = vld.sshfl [vmem:[#allocation1 + $0x20] sm:$0xff pattern:$0x73625140]
        %v2101 = vld.sshfl [vmem:[#allocation1 + $0x28] sm:$0xff pattern:$0x73625140]
        %v2102 = vld.sshfl [vmem:[#allocation1 + $0x30] sm:$0xff pattern:$0x73625140]
        %2103 = vst [vmem:[#allocation1] ss:$4 sm:$0xff] %v1901
        %2104 = vst [vmem:[%s1971] ss:$4 sm:$0xff] %v1904
        %2105 = vst [vmem:[%s1973] ss:$4 sm:$0xff] %v1906
        %2106 = vst [vmem:[%s1975] ss:$4 sm:$0xff] %v1909
        %2107 = vst [vmem:[%s1977] ss:$4 sm:$0xff] %v1912
        %2108 = vst [vmem:[%s1979] ss:$4 sm:$0xff] %v1914
        %2109 = vst [vmem:[%s1981] ss:$4 sm:$0xff] %v1917
        %2110 = vst [vmem:[%s1983] ss:$4 sm:$0xff] %v1920
        %v2111 = vld.sshfl [vmem:[#allocation1] sm:$0xff pattern:$0x73625140]
        %v2112 = vld.sshfl [vmem:[#allocation1 + $0x8] sm:$0xff pattern:$0x73625140]
        %v2113 = vld.sshfl [vmem:[#allocation1 + $0x10] sm:$0xff pattern:$0x73625140]
        %v2114 = vld.sshfl [vmem:[#allocation1 + $0x20] sm:$0xff pattern:$0x73625140]
        %v2115 = vld.sshfl [vmem:[#allocation1 + $0x28] sm:$0xff pattern:$0x73625140]
        %v2116 = vld.sshfl [vmem:[#allocation1 + $0x30] sm:$0xff pattern:$0x73625140]
        %2117 = vst [vmem:[#allocation1] ss:$4 sm:$0xff] %v1923
        %2118 = vst [vmem:[%s1971] ss:$4 sm:$0xff] %v1925
        %2119 = vst [vmem:[%s1973] ss:$4 sm:$0xff] %v1928
        %2120 = vst [vmem:[%s1975] ss:$4 sm:$0xff] %v1931
        %2121 = vst [vmem:[%s1977] ss:$4 sm:$0xff] %v1933
        %2122 = vst [vmem:[%s1979] ss:$4 sm:$0xff] %v1936
        %2123 = vst [vmem:[%s1981] ss:$4 sm:$0xff] %v1939
        %2124 = vst [vmem:[%s1983] ss:$4 sm:$0xff] %v1942
        %v2125 = vld.sshfl [vmem:[#allocation1] sm:$0xff pattern:$0x73625140]
        %v2126 = vld.sshfl [vmem:[#allocation1 + $0x8] sm:$0xff pattern:$0x73625140]
        %v2127 = vld.sshfl [vmem:[#allocation1 + $0x10] sm:$0xff pattern:$0x73625140]
        %v2128 = vld.sshfl [vmem:[#allocation1 + $0x20] sm:$0xff pattern:$0x73625140]
        %v2129 = vld.sshfl [vmem:[#allocation1 + $0x28] sm:$0xff pattern:$0x73625140]
        %v2130 = vld.sshfl [vmem:[#allocation1 + $0x30] sm:$0xff pattern:$0x73625140]
        %2131 = vst [vmem:[#allocation1] ss:$4 sm:$0xff] %v1944
        %2132 = vst [vmem:[%s1971] ss:$4 sm:$0xff] %v1947
        %2133 = vst [vmem:[%s1973] ss:$4 sm:$0xff] %v1950
        %2134 = vst [vmem:[%s1975] ss:$4 sm:$0xff] %v1952
        %2135 = vst [vmem:[%s1977] ss:$4 sm:$0xff] %v1955
        %2136 = vst [vmem:[%s1979] ss:$4 sm:$0xff] %v1958
        %2137 = vst [vmem:[%s1981] ss:$4 sm:$0xff] %v1961
        %2138 = vst [vmem:[%s1983] ss:$4 sm:$0xff] %v1963
        %v2139 = vld.sshfl [vmem:[#allocation1] sm:$0xff pattern:$0x73625140]
        %v2140 = vld.sshfl [vmem:[#allocation1 + $0x8] sm:$0xff pattern:$0x73625140]
        %v2141 = vld.sshfl [vmem:[#allocation1 + $0x10] sm:$0xff pattern:$0x73625140]
        %v2142 = vld.sshfl [vmem:[#allocation1 + $0x20] sm:$0xff pattern:$0x73625140]
        %v2143 = vld.sshfl [vmem:[#allocation1 + $0x28] sm:$0xff pattern:$0x73625140]
        %v2144 = vld.sshfl [vmem:[#allocation1 + $0x30] sm:$0xff pattern:$0x73625140]
        %2145 = vst [vmem:[#allocation1] ss:$4 sm:$0xff] %v1966
        %2146 = vst [vmem:[%s1971] ss:$4 sm:$0xff] %v1969
        %v2147 = vld.sshfl [vmem:[#allocation1] sm:$0xff pattern:$0x73625140]
        %v2148 = vld.sshfl [vmem:[#allocation1 + $0x8] sm:$0xff pattern:$0x73625140]
        %v2149 = vld.sshfl [vmem:[#allocation1 + $0x10] sm:$0xff pattern:$0x73625140]
        %v2225 = vpack.c.bf16 %v1988, %v1985
        %v2226 = vpack.c.bf16 %v1989, %v1986
        %v2227 = vpack.c.bf16 %v1990, %v1987
        %v2228 = vpack.c.bf16 %v2002, %v1999
        %v2229 = vpack.c.bf16 %v2003, %v2000
        %v2230 = vpack.c.bf16 %v2004, %v2001
        %v2231 = vpack.c.bf16 %v2016, %v2013
        %v2232 = vpack.c.bf16 %v2017, %v2014
        %v2233 = vpack.c.bf16 %v2018, %v2015
        %v2234 = vpack.c.bf16 %v2030, %v2027
        %v2235 = vpack.c.bf16 %v2031, %v2028
        %v2236 = vpack.c.bf16 %v2032, %v2029
        %v2237 = vpack.c.bf16 %v2044, %v2041
        %v2238 = vpack.c.bf16 %v2045, %v2042
        %v2239 = vpack.c.bf16 %v2046, %v2043
        %v2240 = vpack.c.bf16 %v2058, %v2055
        %v2241 = vpack.c.bf16 %v2059, %v2056
        %v2242 = vpack.c.bf16 %v2060, %v2057
        %v2243 = vpack.c.bf16 %v2072, %v2069
        %v2244 = vpack.c.bf16 %v2073, %v2070
        %v2245 = vpack.c.bf16 %v2074, %v2071
        %v2246 = vpack.c.bf16 %v2086, %v2083
        %v2247 = vpack.c.bf16 %v2087, %v2084
        %v2248 = vpack.c.bf16 %v2088, %v2085
        %v2249 = vpack.c.bf16 %v2100, %v2097
        %v2250 = vpack.c.bf16 %v2101, %v2098
        %v2251 = vpack.c.bf16 %v2102, %v2099
        %v2252 = vpack.c.bf16 %v2114, %v2111
        %v2253 = vpack.c.bf16 %v2115, %v2112
        %v2254 = vpack.c.bf16 %v2116, %v2113
        %v2255 = vpack.c.bf16 %v2128, %v2125
        %v2256 = vpack.c.bf16 %v2129, %v2126
        %v2257 = vpack.c.bf16 %v2130, %v2127
        %v2258 = vpack.c.bf16 %v2142, %v2139
        %v2259 = vpack.c.bf16 %v2143, %v2140
        %v2260 = vpack.c.bf16 %v2144, %v2141
        %v2261 = vpack.c.bf16 %v2147, %v2147
        %v2262 = vpack.c.bf16 %v2148, %v2148
        %v2263 = vpack.c.bf16 %v2149, %v2149
        %v2264 = vld [vmem:[%s3] sm:$0xff]
        %v2265 = vld [vmem:[%s3 + $0x8] sm:$0xff]
        %v2266 = vld [vmem:[%s3 + $0x10] sm:$0xff]
        %v2267 = vld [vmem:[%s3 + $0x18] sm:$0xff]
        %v2268 = vld [vmem:[%s3 + $0x20] sm:$0xff]
        %v2269 = vld [vmem:[%s3 + $0x28] sm:$0xff]
        %v2270 = vld [vmem:[%s3 + $0x30] sm:$0xff]
        %v2271 = vld [vmem:[%s3 + $0x38] sm:$0xff]
        %v2272 = vld [vmem:[%s3 + $0x40] sm:$0xff]
        %v2273 = vld [vmem:[%s3 + $0x48] sm:$0xff]
        %v2274 = vld [vmem:[%s3 + $0x50] sm:$0xff]
        %v2275 = vld [vmem:[%s3 + $0x58] sm:$0xff]
        %v2276 = vld [vmem:[%s3 + $0x60] sm:$0xff]
        %v2277 = vld [vmem:[%s3 + $0x68] sm:$0xff]
        %v2278 = vld [vmem:[%s3 + $0x70] sm:$0xff]
        %v2279 = vld [vmem:[%s3 + $0x78] sm:$0xff]
        %v2280 = vld [vmem:[%s3 + $0x80] sm:$0xff]
        %v2281 = vld [vmem:[%s3 + $0x88] sm:$0xff]
        %v2282 = vld [vmem:[%s3 + $0x90] sm:$0xff]
        %v2283 = vld [vmem:[%s3 + $0x98] sm:$0xff]
        %v2284 = vld [vmem:[%s3 + $0xa0] sm:$0xff]
        %v2285 = vld [vmem:[%s3 + $0xa8] sm:$0xff]
        %v2286 = vld [vmem:[%s3 + $0xb0] sm:$0xff]
        %v2287 = vld [vmem:[%s3 + $0xb8] sm:$0xff]
        %v2288 = vld [vmem:[%s3 + $0xc0] sm:$0xff]
        %v2289 = vld [vmem:[%s3 + $0xc8] sm:$0xff]
        %v2290 = vld [vmem:[%s3 + $0xd0] sm:$0xff]
        %v2291 = vld [vmem:[%s3 + $0xd8] sm:$0xff]
        %v2292 = vld [vmem:[%s3 + $0xe0] sm:$0xff]
        %v2293 = vld [vmem:[%s3 + $0xe8] sm:$0xff]
        %v2294 = vld [vmem:[%s3 + $0xf0] sm:$0xff]
        %v2295 = vld [vmem:[%s3 + $0xf8] sm:$0xff]
        %v2296 = vld [vmem:[%s3 + $0x100] sm:$0xff]
        %v2297 = vld [vmem:[%s3 + $0x108] sm:$0xff]
        %v2298 = vld [vmem:[%s3 + $0x110] sm:$0xff]
        %v2299 = vld [vmem:[%s3 + $0x118] sm:$0xff]
        %v2336 = vunpack.c.l.b16 %v2264
        %v2337 = vunpack.c.h.b16 %v2264
        %v2338 = vunpack.c.l.b16 %v2265
        %v2339 = vunpack.c.h.b16 %v2265
        %v2340 = vunpack.c.l.b16 %v2266
        %v2341 = vunpack.c.h.b16 %v2266
        %v2342 = vunpack.c.l.b16 %v2267
        %v2343 = vunpack.c.h.b16 %v2267
        %v2344 = vunpack.c.l.b16 %v2268
        %v2345 = vunpack.c.h.b16 %v2268
        %v2346 = vunpack.c.l.b16 %v2269
        %v2347 = vunpack.c.h.b16 %v2269
        %v2348 = vunpack.c.l.b16 %v2270
        %v2349 = vunpack.c.h.b16 %v2270
        %v2350 = vunpack.c.l.b16 %v2271
        %v2351 = vunpack.c.h.b16 %v2271
        %v2352 = vunpack.c.l.b16 %v2272
        %v2353 = vunpack.c.h.b16 %v2272
        %v2354 = vunpack.c.l.b16 %v2273
        %v2355 = vunpack.c.h.b16 %v2273
        %v2356 = vunpack.c.l.b16 %v2274
        %v2357 = vunpack.c.h.b16 %v2274
        %v2358 = vunpack.c.l.b16 %v2275
        %v2359 = vunpack.c.h.b16 %v2275
        %v2360 = vunpack.c.l.b16 %v2276
        %v2361 = vunpack.c.h.b16 %v2276
        %v2362 = vunpack.c.l.b16 %v2277
        %v2363 = vunpack.c.h.b16 %v2277
        %v2364 = vunpack.c.l.b16 %v2278
        %v2365 = vunpack.c.h.b16 %v2278
        %v2366 = vunpack.c.l.b16 %v2279
        %v2367 = vunpack.c.h.b16 %v2279
        %v2368 = vunpack.c.l.b16 %v2280
        %v2369 = vunpack.c.h.b16 %v2280
        %v2370 = vunpack.c.l.b16 %v2281
        %v2371 = vunpack.c.h.b16 %v2281
        %v2372 = vunpack.c.l.b16 %v2282
        %v2373 = vunpack.c.h.b16 %v2282
        %v2374 = vunpack.c.l.b16 %v2283
        %v2375 = vunpack.c.h.b16 %v2283
        %v2376 = vunpack.c.l.b16 %v2284
        %v2377 = vunpack.c.h.b16 %v2284
        %v2378 = vunpack.c.l.b16 %v2285
        %v2379 = vunpack.c.h.b16 %v2285
        %v2380 = vunpack.c.l.b16 %v2286
        %v2381 = vunpack.c.h.b16 %v2286
        %v2382 = vunpack.c.l.b16 %v2287
        %v2383 = vunpack.c.h.b16 %v2287
        %v2384 = vunpack.c.l.b16 %v2288
        %v2385 = vunpack.c.h.b16 %v2288
        %v2386 = vunpack.c.l.b16 %v2289
        %v2387 = vunpack.c.h.b16 %v2289
        %v2388 = vunpack.c.l.b16 %v2290
        %v2389 = vunpack.c.h.b16 %v2290
        %v2390 = vunpack.c.l.b16 %v2291
        %v2391 = vunpack.c.h.b16 %v2291
        %v2392 = vunpack.c.l.b16 %v2292
        %v2393 = vunpack.c.h.b16 %v2292
        %v2394 = vunpack.c.l.b16 %v2293
        %v2395 = vunpack.c.h.b16 %v2293
        %v2396 = vunpack.c.l.b16 %v2294
        %v2397 = vunpack.c.h.b16 %v2294
        %v2398 = vunpack.c.l.b16 %v2295
        %v2399 = vunpack.c.h.b16 %v2295
        %v2400 = vunpack.c.l.b16 %v2296
        %v2401 = vunpack.c.h.b16 %v2296
        %v2402 = vunpack.c.l.b16 %v2297
        %v2403 = vunpack.c.h.b16 %v2297
        %v2404 = vunpack.c.l.b16 %v2298
        %v2405 = vunpack.c.h.b16 %v2298
        %v2406 = vunpack.c.l.b16 %v2299
        %v2407 = vunpack.c.h.b16 %v2299
        %v2408 = vpack.c.b16 %v2338, %v2336
        %v2409 = vpack.c.b16 %v2339, %v2337
        %v2410 = vpack.c.b16 %v2342, %v2340
        %v2411 = vpack.c.b16 %v2343, %v2341
        %v2412 = vpack.c.b16 %v2346, %v2344
        %v2413 = vpack.c.b16 %v2347, %v2345
        %v2414 = vpack.c.b16 %v2350, %v2348
        %v2415 = vpack.c.b16 %v2351, %v2349
        %v2416 = vpack.c.b16 %v2354, %v2352
        %v2417 = vpack.c.b16 %v2355, %v2353
        %v2418 = vpack.c.b16 %v2358, %v2356
        %v2419 = vpack.c.b16 %v2359, %v2357
        %v2420 = vpack.c.b16 %v2362, %v2360
        %v2421 = vpack.c.b16 %v2363, %v2361
        %v2422 = vpack.c.b16 %v2366, %v2364
        %v2423 = vpack.c.b16 %v2367, %v2365
        %v2424 = vpack.c.b16 %v2370, %v2368
        %v2425 = vpack.c.b16 %v2371, %v2369
        %v2426 = vpack.c.b16 %v2374, %v2372
        %v2427 = vpack.c.b16 %v2375, %v2373
        %v2428 = vpack.c.b16 %v2378, %v2376
        %v2429 = vpack.c.b16 %v2379, %v2377
        %v2430 = vpack.c.b16 %v2382, %v2380
        %v2431 = vpack.c.b16 %v2383, %v2381
        %v2432 = vpack.c.b16 %v2386, %v2384
        %v2433 = vpack.c.b16 %v2387, %v2385
        %v2434 = vpack.c.b16 %v2390, %v2388
        %v2435 = vpack.c.b16 %v2391, %v2389
        %v2436 = vpack.c.b16 %v2394, %v2392
        %v2437 = vpack.c.b16 %v2395, %v2393
        %v2438 = vpack.c.b16 %v2398, %v2396
        %v2439 = vpack.c.b16 %v2399, %v2397
        %v2440 = vpack.c.b16 %v2402, %v2400
        %v2441 = vpack.c.b16 %v2403, %v2401
        %v2442 = vpack.c.b16 %v2406, %v2404
        %v2443 = vpack.c.b16 %v2407, %v2405
        %v2481 = vsel %vm1416, %v2227, 0
        %v2484 = vsel %vm1416, %v2230, 0
        %v2487 = vsel %vm1416, %v2233, 0
        %v2490 = vsel %vm1416, %v2236, 0
        %v2493 = vsel %vm1416, %v2239, 0
        %v2496 = vsel %vm1416, %v2242, 0
        %v2499 = vsel %vm1416, %v2245, 0
        %v2502 = vsel %vm1416, %v2248, 0
        %v2505 = vsel %vm1416, %v2251, 0
        %v2508 = vsel %vm1416, %v2254, 0
        %v2511 = vsel %vm1416, %v2257, 0
        %v2514 = vsel %vm1416, %v2260, 0
        %v2517 = vsel %vm1416, %v2263, 0
        %2519 = vmatpush.bf16.msra.mxu0 %v2422
        %2520 = vmatpush.bf16.msra.mxu0 %v2420
        %2521 = vmatpush.bf16.msra.mxu0 %v2418
        %2522 = vmatpush.bf16.msra.mxu0 %v2416
        %2523 = vmatpush.bf16.msra.mxu0 %v2414
        %2524 = vmatpush.bf16.msra.mxu0 %v2412
        %2525 = vmatpush.bf16.msra.mxu0 %v2410
        %2526 = vmatpush.bf16.msra.mxu0 %v2408
        %2527 = vmatmul.bf16.gmra.mxu0 %v2225
        %v2528 = vpop.f32.mrf.mxu0
        %v2529 = vadd.f32 0.0, %v2528
        %v2530 = vpop.f32.mrf.mxu0
        %v2531 = vadd.f32 0.0, %v2530
        %2532 = vmatmul.bf16.gmra.mxu0 %v2228
        %v2533 = vpop.f32.mrf.mxu0
        %v2534 = vadd.f32 0.0, %v2533
        %v2535 = vpop.f32.mrf.mxu0
        %v2536 = vadd.f32 0.0, %v2535
        %2537 = vmatmul.bf16.gmra.mxu0 %v2231
        %v2538 = vpop.f32.mrf.mxu0
        %v2539 = vadd.f32 0.0, %v2538
        %v2540 = vpop.f32.mrf.mxu0
        %v2541 = vadd.f32 0.0, %v2540
        %2542 = vmatmul.bf16.gmra.mxu0 %v2234
        %v2543 = vpop.f32.mrf.mxu0
        %v2544 = vadd.f32 0.0, %v2543
        %v2545 = vpop.f32.mrf.mxu0
        %v2546 = vadd.f32 0.0, %v2545
        %2547 = vmatmul.bf16.gmra.mxu0 %v2237
        %v2548 = vpop.f32.mrf.mxu0
        %v2549 = vadd.f32 0.0, %v2548
        %v2550 = vpop.f32.mrf.mxu0
        %v2551 = vadd.f32 0.0, %v2550
        %2552 = vmatmul.bf16.gmra.mxu0 %v2240
        %v2553 = vpop.f32.mrf.mxu0
        %v2554 = vadd.f32 0.0, %v2553
        %v2555 = vpop.f32.mrf.mxu0
        %v2556 = vadd.f32 0.0, %v2555
        %2557 = vmatmul.bf16.gmra.mxu0 %v2243
        %v2558 = vpop.f32.mrf.mxu0
        %v2559 = vadd.f32 0.0, %v2558
        %v2560 = vpop.f32.mrf.mxu0
        %v2561 = vadd.f32 0.0, %v2560
        %2562 = vmatmul.bf16.gmra.mxu0 %v2246
        %v2563 = vpop.f32.mrf.mxu0
        %v2564 = vadd.f32 0.0, %v2563
        %v2565 = vpop.f32.mrf.mxu0
        %v2566 = vadd.f32 0.0, %v2565
        %2567 = vmatmul.bf16.gmra.mxu0 %v2249
        %v2568 = vpop.f32.mrf.mxu0
        %v2569 = vadd.f32 0.0, %v2568
        %v2570 = vpop.f32.mrf.mxu0
        %v2571 = vadd.f32 0.0, %v2570
        %2572 = vmatmul.bf16.gmra.mxu0 %v2252
        %v2573 = vpop.f32.mrf.mxu0
        %v2574 = vadd.f32 0.0, %v2573
        %v2575 = vpop.f32.mrf.mxu0
        %v2576 = vadd.f32 0.0, %v2575
        %2577 = vmatmul.bf16.gmra.mxu0 %v2255
        %v2578 = vpop.f32.mrf.mxu0
        %v2579 = vadd.f32 0.0, %v2578
        %v2580 = vpop.f32.mrf.mxu0
        %v2581 = vadd.f32 0.0, %v2580
        %2582 = vmatmul.bf16.gmra.mxu0 %v2258
        %v2583 = vpop.f32.mrf.mxu0
        %v2584 = vadd.f32 0.0, %v2583
        %v2585 = vpop.f32.mrf.mxu0
        %v2586 = vadd.f32 0.0, %v2585
        %2587 = vmatmul.bf16.gmra.mxu0 %v2261
        %v2588 = vpop.f32.mrf.mxu0
        %v2589 = vadd.f32 0.0, %v2588
        %v2590 = vpop.f32.mrf.mxu0
        %2591 = vdwg.mxu0
        %2592 = vmatpush.bf16.msra.mxu0 %v2438
        %2593 = vmatpush.bf16.msra.mxu0 %v2436
        %2594 = vmatpush.bf16.msra.mxu0 %v2434
        %2595 = vmatpush.bf16.msra.mxu0 %v2432
        %2596 = vmatpush.bf16.msra.mxu0 %v2430
        %2597 = vmatpush.bf16.msra.mxu0 %v2428
        %2598 = vmatpush.bf16.msra.mxu0 %v2426
        %2599 = vmatpush.bf16.msra.mxu0 %v2424
        %2600 = vmatmul.bf16.gmra.mxu0 %v2226
        %v2601 = vpop.f32.mrf.mxu0
        %v2602 = vadd.f32 %v2529, %v2601
        %v2603 = vpop.f32.mrf.mxu0
        %v2604 = vadd.f32 %v2531, %v2603
        %2605 = vmatmul.bf16.gmra.mxu0 %v2229
        %v2606 = vpop.f32.mrf.mxu0
        %v2607 = vadd.f32 %v2534, %v2606
        %v2608 = vpop.f32.mrf.mxu0
        %v2609 = vadd.f32 %v2536, %v2608
        %2610 = vmatmul.bf16.gmra.mxu0 %v2232
        %v2611 = vpop.f32.mrf.mxu0
        %v2612 = vadd.f32 %v2539, %v2611
        %v2613 = vpop.f32.mrf.mxu0
        %v2614 = vadd.f32 %v2541, %v2613
        %2615 = vmatmul.bf16.gmra.mxu0 %v2235
        %v2616 = vpop.f32.mrf.mxu0
        %v2617 = vadd.f32 %v2544, %v2616
        %v2618 = vpop.f32.mrf.mxu0
        %v2619 = vadd.f32 %v2546, %v2618
        %2620 = vmatmul.bf16.gmra.mxu0 %v2238
        %v2621 = vpop.f32.mrf.mxu0
        %v2622 = vadd.f32 %v2549, %v2621
        %v2623 = vpop.f32.mrf.mxu0
        %v2624 = vadd.f32 %v2551, %v2623
        %2625 = vmatmul.bf16.gmra.mxu0 %v2241
        %v2626 = vpop.f32.mrf.mxu0
        %v2627 = vadd.f32 %v2554, %v2626
        %v2628 = vpop.f32.mrf.mxu0
        %v2629 = vadd.f32 %v2556, %v2628
        %2630 = vmatmul.bf16.gmra.mxu0 %v2244
        %v2631 = vpop.f32.mrf.mxu0
        %v2632 = vadd.f32 %v2559, %v2631
        %v2633 = vpop.f32.mrf.mxu0
        %v2634 = vadd.f32 %v2561, %v2633
        %2635 = vmatmul.bf16.gmra.mxu0 %v2247
        %v2636 = vpop.f32.mrf.mxu0
        %v2637 = vadd.f32 %v2564, %v2636
        %v2638 = vpop.f32.mrf.mxu0
        %v2639 = vadd.f32 %v2566, %v2638
        %2640 = vmatmul.bf16.gmra.mxu0 %v2250
        %v2641 = vpop.f32.mrf.mxu0
        %v2642 = vadd.f32 %v2569, %v2641
        %v2643 = vpop.f32.mrf.mxu0
        %v2644 = vadd.f32 %v2571, %v2643
        %2645 = vmatmul.bf16.gmra.mxu0 %v2253
        %v2646 = vpop.f32.mrf.mxu0
        %v2647 = vadd.f32 %v2574, %v2646
        %v2648 = vpop.f32.mrf.mxu0
        %v2649 = vadd.f32 %v2576, %v2648
        %2650 = vmatmul.bf16.gmra.mxu0 %v2256
        %v2651 = vpop.f32.mrf.mxu0
        %v2652 = vadd.f32 %v2579, %v2651
        %v2653 = vpop.f32.mrf.mxu0
        %v2654 = vadd.f32 %v2581, %v2653
        %2655 = vmatmul.bf16.gmra.mxu0 %v2259
        %v2656 = vpop.f32.mrf.mxu0
        %v2657 = vadd.f32 %v2584, %v2656
        %v2658 = vpop.f32.mrf.mxu0
        %v2659 = vadd.f32 %v2586, %v2658
        %2660 = vmatmul.bf16.gmra.mxu0 %v2262
        %v2661 = vpop.f32.mrf.mxu0
        %v2662 = vadd.f32 %v2589, %v2661
        %v2663 = vpop.f32.mrf.mxu0
        %2664 = vdwg.mxu0
        %2665 = vmatpush.bf16.msra.mxu0 0
        %2666 = vmatpush.bf16.msra.mxu0 0
        %2667 = vmatpush.bf16.msra.mxu0 0
        %2668 = vmatpush.bf16.msra.mxu0 0
        %2669 = vmatpush.bf16.msra.mxu0 0
        %2670 = vmatpush.bf16.msra.mxu0 0
        %2671 = vmatpush.bf16.msra.mxu0 %v2442
        %2672 = vmatpush.bf16.msra.mxu0 %v2440
        %2673 = vmatmul.bf16.gmra.mxu0 %v2481
        %v2674 = vpop.f32.mrf.mxu0
        %v2675 = vadd.f32 %v2602, %v2674
        %v2676 = vpop.f32.mrf.mxu0
        %v2677 = vadd.f32 %v2604, %v2676
        %2678 = vmatmul.bf16.gmra.mxu0 %v2484
        %v2679 = vpop.f32.mrf.mxu0
        %v2680 = vadd.f32 %v2607, %v2679
        %v2681 = vpop.f32.mrf.mxu0
        %v2682 = vadd.f32 %v2609, %v2681
        %2683 = vmatmul.bf16.gmra.mxu0 %v2487
        %v2684 = vpop.f32.mrf.mxu0
        %v2685 = vadd.f32 %v2612, %v2684
        %v2686 = vpop.f32.mrf.mxu0
        %v2687 = vadd.f32 %v2614, %v2686
        %2688 = vmatmul.bf16.gmra.mxu0 %v2490
        %v2689 = vpop.f32.mrf.mxu0
        %v2690 = vadd.f32 %v2617, %v2689
        %v2691 = vpop.f32.mrf.mxu0
        %v2692 = vadd.f32 %v2619, %v2691
        %2693 = vmatmul.bf16.gmra.mxu0 %v2493
        %v2694 = vpop.f32.mrf.mxu0
        %v2695 = vadd.f32 %v2622, %v2694
        %v2696 = vpop.f32.mrf.mxu0
        %v2697 = vadd.f32 %v2624, %v2696
        %2698 = vmatmul.bf16.gmra.mxu0 %v2496
        %v2699 = vpop.f32.mrf.mxu0
        %v2700 = vadd.f32 %v2627, %v2699
        %v2701 = vpop.f32.mrf.mxu0
        %v2702 = vadd.f32 %v2629, %v2701
        %2703 = vmatmul.bf16.gmra.mxu0 %v2499
        %v2704 = vpop.f32.mrf.mxu0
        %v2705 = vadd.f32 %v2632, %v2704
        %v2706 = vpop.f32.mrf.mxu0
        %v2707 = vadd.f32 %v2634, %v2706
        %2708 = vmatmul.bf16.gmra.mxu0 %v2502
        %v2709 = vpop.f32.mrf.mxu0
        %v2710 = vadd.f32 %v2637, %v2709
        %v2711 = vpop.f32.mrf.mxu0
        %v2712 = vadd.f32 %v2639, %v2711
        %2713 = vmatmul.bf16.gmra.mxu0 %v2505
        %v2714 = vpop.f32.mrf.mxu0
        %v2715 = vadd.f32 %v2642, %v2714
        %v2716 = vpop.f32.mrf.mxu0
        %v2717 = vadd.f32 %v2644, %v2716
        %2718 = vmatmul.bf16.gmra.mxu0 %v2508
        %v2719 = vpop.f32.mrf.mxu0
        %v2720 = vadd.f32 %v2647, %v2719
        %v2721 = vpop.f32.mrf.mxu0
        %v2722 = vadd.f32 %v2649, %v2721
        %2723 = vmatmul.bf16.gmra.mxu0 %v2511
        %v2724 = vpop.f32.mrf.mxu0
        %v2725 = vadd.f32 %v2652, %v2724
        %v2726 = vpop.f32.mrf.mxu0
        %v2727 = vadd.f32 %v2654, %v2726
        %2728 = vmatmul.bf16.gmra.mxu0 %v2514
        %v2729 = vpop.f32.mrf.mxu0
        %v2730 = vadd.f32 %v2657, %v2729
        %v2731 = vpop.f32.mrf.mxu0
        %v2732 = vadd.f32 %v2659, %v2731
        %2733 = vmatmul.bf16.gmra.mxu0 %v2517
        %v2734 = vpop.f32.mrf.mxu0
        %v2735 = vadd.f32 %v2662, %v2734
        %v2736 = vpop.f32.mrf.mxu0
        %2737 = vdwg.mxu0
        %2738 = vmatpush.bf16.msra.mxu0 %v2423
        %2739 = vmatpush.bf16.msra.mxu0 %v2421
        %2740 = vmatpush.bf16.msra.mxu0 %v2419
        %2741 = vmatpush.bf16.msra.mxu0 %v2417
        %2742 = vmatpush.bf16.msra.mxu0 %v2415
        %2743 = vmatpush.bf16.msra.mxu0 %v2413
        %2744 = vmatpush.bf16.msra.mxu0 %v2411
        %2745 = vmatpush.bf16.msra.mxu0 %v2409
        %2746 = vmatmul.bf16.gmra.mxu0 %v2225
        %v2747 = vpop.f32.mrf.mxu0
        %v2748 = vadd.f32 0.0, %v2747
        %v2749 = vpop.f32.mrf.mxu0
        %v2750 = vadd.f32 0.0, %v2749
        %2751 = vmatmul.bf16.gmra.mxu0 %v2228
        %v2752 = vpop.f32.mrf.mxu0
        %v2753 = vadd.f32 0.0, %v2752
        %v2754 = vpop.f32.mrf.mxu0
        %v2755 = vadd.f32 0.0, %v2754
        %2756 = vmatmul.bf16.gmra.mxu0 %v2231
        %v2757 = vpop.f32.mrf.mxu0
        %v2758 = vadd.f32 0.0, %v2757
        %v2759 = vpop.f32.mrf.mxu0
        %v2760 = vadd.f32 0.0, %v2759
        %2761 = vmatmul.bf16.gmra.mxu0 %v2234
        %v2762 = vpop.f32.mrf.mxu0
        %v2763 = vadd.f32 0.0, %v2762
        %v2764 = vpop.f32.mrf.mxu0
        %v2765 = vadd.f32 0.0, %v2764
        %2766 = vmatmul.bf16.gmra.mxu0 %v2237
        %v2767 = vpop.f32.mrf.mxu0
        %v2768 = vadd.f32 0.0, %v2767
        %v2769 = vpop.f32.mrf.mxu0
        %v2770 = vadd.f32 0.0, %v2769
        %2771 = vmatmul.bf16.gmra.mxu0 %v2240
        %v2772 = vpop.f32.mrf.mxu0
        %v2773 = vadd.f32 0.0, %v2772
        %v2774 = vpop.f32.mrf.mxu0
        %v2775 = vadd.f32 0.0, %v2774
        %2776 = vmatmul.bf16.gmra.mxu0 %v2243
        %v2777 = vpop.f32.mrf.mxu0
        %v2778 = vadd.f32 0.0, %v2777
        %v2779 = vpop.f32.mrf.mxu0
        %v2780 = vadd.f32 0.0, %v2779
        %2781 = vmatmul.bf16.gmra.mxu0 %v2246
        %v2782 = vpop.f32.mrf.mxu0
        %v2783 = vadd.f32 0.0, %v2782
        %v2784 = vpop.f32.mrf.mxu0
        %v2785 = vadd.f32 0.0, %v2784
        %2786 = vmatmul.bf16.gmra.mxu0 %v2249
        %v2787 = vpop.f32.mrf.mxu0
        %v2788 = vadd.f32 0.0, %v2787
        %v2789 = vpop.f32.mrf.mxu0
        %v2790 = vadd.f32 0.0, %v2789
        %2791 = vmatmul.bf16.gmra.mxu0 %v2252
        %v2792 = vpop.f32.mrf.mxu0
        %v2793 = vadd.f32 0.0, %v2792
        %v2794 = vpop.f32.mrf.mxu0
        %v2795 = vadd.f32 0.0, %v2794
        %2796 = vmatmul.bf16.gmra.mxu0 %v2255
        %v2797 = vpop.f32.mrf.mxu0
        %v2798 = vadd.f32 0.0, %v2797
        %v2799 = vpop.f32.mrf.mxu0
        %v2800 = vadd.f32 0.0, %v2799
        %2801 = vmatmul.bf16.gmra.mxu0 %v2258
        %v2802 = vpop.f32.mrf.mxu0
        %v2803 = vadd.f32 0.0, %v2802
        %v2804 = vpop.f32.mrf.mxu0
        %v2805 = vadd.f32 0.0, %v2804
        %2806 = vmatmul.bf16.gmra.mxu0 %v2261
        %v2807 = vpop.f32.mrf.mxu0
        %v2808 = vadd.f32 0.0, %v2807
        %v2809 = vpop.f32.mrf.mxu0
        %2810 = vdwg.mxu0
        %2811 = vmatpush.bf16.msra.mxu0 %v2439
        %2812 = vmatpush.bf16.msra.mxu0 %v2437
        %2813 = vmatpush.bf16.msra.mxu0 %v2435
        %2814 = vmatpush.bf16.msra.mxu0 %v2433
        %2815 = vmatpush.bf16.msra.mxu0 %v2431
        %2816 = vmatpush.bf16.msra.mxu0 %v2429
        %2817 = vmatpush.bf16.msra.mxu0 %v2427
        %2818 = vmatpush.bf16.msra.mxu0 %v2425
        %2819 = vmatmul.bf16.gmra.mxu0 %v2226
        %v2820 = vpop.f32.mrf.mxu0
        %v2821 = vadd.f32 %v2748, %v2820
        %v2822 = vpop.f32.mrf.mxu0
        %v2823 = vadd.f32 %v2750, %v2822
        %2824 = vmatmul.bf16.gmra.mxu0 %v2229
        %v2825 = vpop.f32.mrf.mxu0
        %v2826 = vadd.f32 %v2753, %v2825
        %v2827 = vpop.f32.mrf.mxu0
        %v2828 = vadd.f32 %v2755, %v2827
        %2829 = vmatmul.bf16.gmra.mxu0 %v2232
        %v2830 = vpop.f32.mrf.mxu0
        %v2831 = vadd.f32 %v2758, %v2830
        %v2832 = vpop.f32.mrf.mxu0
        %v2833 = vadd.f32 %v2760, %v2832
        %2834 = vmatmul.bf16.gmra.mxu0 %v2235
        %v2835 = vpop.f32.mrf.mxu0
        %v2836 = vadd.f32 %v2763, %v2835
        %v2837 = vpop.f32.mrf.mxu0
        %v2838 = vadd.f32 %v2765, %v2837
        %2839 = vmatmul.bf16.gmra.mxu0 %v2238
        %v2840 = vpop.f32.mrf.mxu0
        %v2841 = vadd.f32 %v2768, %v2840
        %v2842 = vpop.f32.mrf.mxu0
        %v2843 = vadd.f32 %v2770, %v2842
        %2844 = vmatmul.bf16.gmra.mxu0 %v2241
        %v2845 = vpop.f32.mrf.mxu0
        %v2846 = vadd.f32 %v2773, %v2845
        %v2847 = vpop.f32.mrf.mxu0
        %v2848 = vadd.f32 %v2775, %v2847
        %2849 = vmatmul.bf16.gmra.mxu0 %v2244
        %v2850 = vpop.f32.mrf.mxu0
        %v2851 = vadd.f32 %v2778, %v2850
        %v2852 = vpop.f32.mrf.mxu0
        %v2853 = vadd.f32 %v2780, %v2852
        %2854 = vmatmul.bf16.gmra.mxu0 %v2247
        %v2855 = vpop.f32.mrf.mxu0
        %v2856 = vadd.f32 %v2783, %v2855
        %v2857 = vpop.f32.mrf.mxu0
        %v2858 = vadd.f32 %v2785, %v2857
        %2859 = vmatmul.bf16.gmra.mxu0 %v2250
        %v2860 = vpop.f32.mrf.mxu0
        %v2861 = vadd.f32 %v2788, %v2860
        %v2862 = vpop.f32.mrf.mxu0
        %v2863 = vadd.f32 %v2790, %v2862
        %2864 = vmatmul.bf16.gmra.mxu0 %v2253
        %v2865 = vpop.f32.mrf.mxu0
        %v2866 = vadd.f32 %v2793, %v2865
        %v2867 = vpop.f32.mrf.mxu0
        %v2868 = vadd.f32 %v2795, %v2867
        %2869 = vmatmul.bf16.gmra.mxu0 %v2256
        %v2870 = vpop.f32.mrf.mxu0
        %v2871 = vadd.f32 %v2798, %v2870
        %v2872 = vpop.f32.mrf.mxu0
        %v2873 = vadd.f32 %v2800, %v2872
        %2874 = vmatmul.bf16.gmra.mxu0 %v2259
        %v2875 = vpop.f32.mrf.mxu0
        %v2876 = vadd.f32 %v2803, %v2875
        %v2877 = vpop.f32.mrf.mxu0
        %v2878 = vadd.f32 %v2805, %v2877
        %2879 = vmatmul.bf16.gmra.mxu0 %v2262
        %v2880 = vpop.f32.mrf.mxu0
        %v2881 = vadd.f32 %v2808, %v2880
        %v2882 = vpop.f32.mrf.mxu0
        %2883 = vdwg.mxu0
        %2884 = vmatpush.bf16.msra.mxu0 0
        %2885 = vmatpush.bf16.msra.mxu0 0
        %2886 = vmatpush.bf16.msra.mxu0 0
        %2887 = vmatpush.bf16.msra.mxu0 0
        %2888 = vmatpush.bf16.msra.mxu0 0
        %2889 = vmatpush.bf16.msra.mxu0 0
        %2890 = vmatpush.bf16.msra.mxu0 %v2443
        %2891 = vmatpush.bf16.msra.mxu0 %v2441
        %2892 = vmatmul.bf16.gmra.mxu0 %v2481
        %v2893 = vpop.f32.mrf.mxu0
        %v2894 = vadd.f32 %v2821, %v2893
        %v2895 = vpop.f32.mrf.mxu0
        %v2896 = vadd.f32 %v2823, %v2895
        %2897 = vmatmul.bf16.gmra.mxu0 %v2484
        %v2898 = vpop.f32.mrf.mxu0
        %v2899 = vadd.f32 %v2826, %v2898
        %v2900 = vpop.f32.mrf.mxu0
        %v2901 = vadd.f32 %v2828, %v2900
        %2902 = vmatmul.bf16.gmra.mxu0 %v2487
        %v2903 = vpop.f32.mrf.mxu0
        %v2904 = vadd.f32 %v2831, %v2903
        %v2905 = vpop.f32.mrf.mxu0
        %v2906 = vadd.f32 %v2833, %v2905
        %2907 = vmatmul.bf16.gmra.mxu0 %v2490
        %v2908 = vpop.f32.mrf.mxu0
        %v2909 = vadd.f32 %v2836, %v2908
        %v2910 = vpop.f32.mrf.mxu0
        %v2911 = vadd.f32 %v2838, %v2910
        %2912 = vmatmul.bf16.gmra.mxu0 %v2493
        %v2913 = vpop.f32.mrf.mxu0
        %v2914 = vadd.f32 %v2841, %v2913
        %v2915 = vpop.f32.mrf.mxu0
        %v2916 = vadd.f32 %v2843, %v2915
        %2917 = vmatmul.bf16.gmra.mxu0 %v2496
        %v2918 = vpop.f32.mrf.mxu0
        %v2919 = vadd.f32 %v2846, %v2918
        %v2920 = vpop.f32.mrf.mxu0
        %v2921 = vadd.f32 %v2848, %v2920
        %2922 = vmatmul.bf16.gmra.mxu0 %v2499
        %v2923 = vpop.f32.mrf.mxu0
        %v2924 = vadd.f32 %v2851, %v2923
        %v2925 = vpop.f32.mrf.mxu0
        %v2926 = vadd.f32 %v2853, %v2925
        %2927 = vmatmul.bf16.gmra.mxu0 %v2502
        %v2928 = vpop.f32.mrf.mxu0
        %v2929 = vadd.f32 %v2856, %v2928
        %v2930 = vpop.f32.mrf.mxu0
        %v2931 = vadd.f32 %v2858, %v2930
        %2932 = vmatmul.bf16.gmra.mxu0 %v2505
        %v2933 = vpop.f32.mrf.mxu0
        %v2934 = vadd.f32 %v2861, %v2933
        %v2935 = vpop.f32.mrf.mxu0
        %v2936 = vadd.f32 %v2863, %v2935
        %2937 = vmatmul.bf16.gmra.mxu0 %v2508
        %v2938 = vpop.f32.mrf.mxu0
        %v2939 = vadd.f32 %v2866, %v2938
        %v2940 = vpop.f32.mrf.mxu0
        %v2941 = vadd.f32 %v2868, %v2940
        %2942 = vmatmul.bf16.gmra.mxu0 %v2511
        %v2943 = vpop.f32.mrf.mxu0
        %v2944 = vadd.f32 %v2871, %v2943
        %v2945 = vpop.f32.mrf.mxu0
        %v2946 = vadd.f32 %v2873, %v2945
        %2947 = vmatmul.bf16.gmra.mxu0 %v2514
        %v2948 = vpop.f32.mrf.mxu0
        %v2949 = vadd.f32 %v2876, %v2948
        %v2950 = vpop.f32.mrf.mxu0
        %v2951 = vadd.f32 %v2878, %v2950
        %2952 = vmatmul.bf16.gmra.mxu0 %v2517
        %v2953 = vpop.f32.mrf.mxu0
        %v2954 = vadd.f32 %v2881, %v2953
        %v2955 = vpop.f32.mrf.mxu0
        %2956 = vdwg.mxu0
        %2957 = vst [vmem:[%s254] sm:$0xff] %v2675
        %2958 = vst [vmem:[%s254 + $0x8] sm:$0xff] %v2894
        %2959 = vst [vmem:[%s254 + $0x10] sm:$0xff] %v2677
        %2960 = vst [vmem:[%s254 + $0x18] sm:$0xff] %v2896
        %2961 = vst [vmem:[%s254 + $0x20] sm:$0xff] %v2680
        %2962 = vst [vmem:[%s254 + $0x28] sm:$0xff] %v2899
        %2963 = vst [vmem:[%s254 + $0x30] sm:$0xff] %v2682
        %2964 = vst [vmem:[%s254 + $0x38] sm:$0xff] %v2901
        %2965 = vst [vmem:[%s254 + $0x40] sm:$0xff] %v2685
        %2966 = vst [vmem:[%s254 + $0x48] sm:$0xff] %v2904
        %2967 = vst [vmem:[%s254 + $0x50] sm:$0xff] %v2687
        %2968 = vst [vmem:[%s254 + $0x58] sm:$0xff] %v2906
        %2969 = vst [vmem:[%s254 + $0x60] sm:$0xff] %v2690
        %2970 = vst [vmem:[%s254 + $0x68] sm:$0xff] %v2909
        %2971 = vst [vmem:[%s254 + $0x70] sm:$0xff] %v2692
        %2972 = vst [vmem:[%s254 + $0x78] sm:$0xff] %v2911
        %2973 = vst [vmem:[%s254 + $0x80] sm:$0xff] %v2695
        %2974 = vst [vmem:[%s254 + $0x88] sm:$0xff] %v2914
        %2975 = vst [vmem:[%s254 + $0x90] sm:$0xff] %v2697
        %2976 = vst [vmem:[%s254 + $0x98] sm:$0xff] %v2916
        %2977 = vst [vmem:[%s254 + $0xa0] sm:$0xff] %v2700
        %2978 = vst [vmem:[%s254 + $0xa8] sm:$0xff] %v2919
        %2979 = vst [vmem:[%s254 + $0xb0] sm:$0xff] %v2702
        %2980 = vst [vmem:[%s254 + $0xb8] sm:$0xff] %v2921
        %2981 = vst [vmem:[%s254 + $0xc0] sm:$0xff] %v2705
        %2982 = vst [vmem:[%s254 + $0xc8] sm:$0xff] %v2924
        %2983 = vst [vmem:[%s254 + $0xd0] sm:$0xff] %v2707
        %2984 = vst [vmem:[%s254 + $0xd8] sm:$0xff] %v2926
        %2985 = vst [vmem:[%s254 + $0xe0] sm:$0xff] %v2710
        %2986 = vst [vmem:[%s254 + $0xe8] sm:$0xff] %v2929
        %2987 = vst [vmem:[%s254 + $0xf0] sm:$0xff] %v2712
        %2988 = vst [vmem:[%s254 + $0xf8] sm:$0xff] %v2931
        %2989 = vst [vmem:[%s254 + $0x100] sm:$0xff] %v2715
        %2990 = vst [vmem:[%s254 + $0x108] sm:$0xff] %v2934
        %2991 = vst [vmem:[%s254 + $0x110] sm:$0xff] %v2717
        %2992 = vst [vmem:[%s254 + $0x118] sm:$0xff] %v2936
        %2993 = vst [vmem:[%s254 + $0x120] sm:$0xff] %v2720
        %2994 = vst [vmem:[%s254 + $0x128] sm:$0xff] %v2939
        %2995 = vst [vmem:[%s254 + $0x130] sm:$0xff] %v2722
        %2996 = vst [vmem:[%s254 + $0x138] sm:$0xff] %v2941
        %2997 = vst [vmem:[%s254 + $0x140] sm:$0xff] %v2725
        %2998 = vst [vmem:[%s254 + $0x148] sm:$0xff] %v2944
        %2999 = vst [vmem:[%s254 + $0x150] sm:$0xff] %v2727
        %3000 = vst [vmem:[%s254 + $0x158] sm:$0xff] %v2946
        %3001 = vst [vmem:[%s254 + $0x160] sm:$0xff] %v2730
        %3002 = vst [vmem:[%s254 + $0x168] sm:$0xff] %v2949
        %3003 = vst [vmem:[%s254 + $0x170] sm:$0xff] %v2732
        %3004 = vst [vmem:[%s254 + $0x178] sm:$0xff] %v2951
        %3005 = vst [vmem:[%s254 + $0x180] sm:$0xf] %v2735
        %3006 = vst [vmem:[%s254 + $0x188] sm:$0xf] %v2954
        %p3007 = scmp.eq.s32.totalorder %s29, 0
        // Predicated region
        $region37: #{tpu_custom_call.1} parent=31 // pred_check
          %p3008 = pneg %p3007
        $region38: #{tpu_custom_call.1} parent=31 // pred_check_branch
          %3010 = sbr.rel (%p3008) target = $region40
        $region39: #{tpu_custom_call.1} parent=31 // pred_region
          %3011 = vst [vmem:[#allocation7] sm:$0xf] 0.0
        $region40: #{tpu_custom_call.1} parent=31 // pred_fallthru
          _
        %v3012 = vadd.f32 %v2675, %v2677
        %v3013 = vadd.f32 %v3012, %v2680
        %v3014 = vadd.f32 %v3013, %v2682
        %v3015 = vadd.f32 %v3014, %v2685
        %v3016 = vadd.f32 %v3015, %v2687
        %v3017 = vadd.f32 %v3016, %v2690
        %v3018 = vadd.f32 %v3017, %v2692
        %v3019 = vadd.f32 %v3018, %v2695
        %v3020 = vadd.f32 %v3019, %v2697
        %v3021 = vadd.f32 %v3020, %v2700
        %v3022 = vadd.f32 %v3021, %v2702
        %v3023 = vadd.f32 %v3022, %v2705
        %v3024 = vadd.f32 %v3023, %v2707
        %v3025 = vadd.f32 %v3024, %v2710
        %v3026 = vadd.f32 %v3025, %v2712
        %v3027 = vadd.f32 %v3026, %v2715
        %v3028 = vadd.f32 %v3027, %v2717
        %v3029 = vadd.f32 %v3028, %v2720
        %v3030 = vadd.f32 %v3029, %v2722
        %v3031 = vadd.f32 %v3030, %v2725
        %v3032 = vadd.f32 %v3031, %v2727
        %v3033 = vadd.f32 %v3032, %v2730
        %v3034 = vadd.f32 %v3033, %v2732
        %v3035 = vsel %vm1701, %v2735, 0.0
        %v3036 = vadd.f32 %v3034, %v3035
        %v3037 = vrot.slane %v3036, 4
        %v3038 = vadd.f32 %v3036, %v3037
        %v3039 = vrot.slane %v3038, 2
        %v3040 = vadd.f32 %v3038, %v3039
        %v3041 = vrot.slane %v3040, 1
        %v3042 = vadd.f32 %v3040, %v3041
        %v3043 = vadd.f32 %v2894, %v2896
        %v3044 = vadd.f32 %v3043, %v2899
        %v3045 = vadd.f32 %v3044, %v2901
        %v3046 = vadd.f32 %v3045, %v2904
        %v3047 = vadd.f32 %v3046, %v2906
        %v3048 = vadd.f32 %v3047, %v2909
        %v3049 = vadd.f32 %v3048, %v2911
        %v3050 = vadd.f32 %v3049, %v2914
        %v3051 = vadd.f32 %v3050, %v2916
        %v3052 = vadd.f32 %v3051, %v2919
        %v3053 = vadd.f32 %v3052, %v2921
        %v3054 = vadd.f32 %v3053, %v2924
        %v3055 = vadd.f32 %v3054, %v2926
        %v3056 = vadd.f32 %v3055, %v2929
        %v3057 = vadd.f32 %v3056, %v2931
        %v3058 = vadd.f32 %v3057, %v2934
        %v3059 = vadd.f32 %v3058, %v2936
        %v3060 = vadd.f32 %v3059, %v2939
        %v3061 = vadd.f32 %v3060, %v2941
        %v3062 = vadd.f32 %v3061, %v2944
        %v3063 = vadd.f32 %v3062, %v2946
        %v3064 = vadd.f32 %v3063, %v2949
        %v3065 = vadd.f32 %v3064, %v2951
        %v3066 = vsel %vm1701, %v2954, 0.0
        %v3067 = vadd.f32 %v3065, %v3066
        %v3068 = vrot.slane %v3067, 4
        %v3069 = vadd.f32 %v3067, %v3068
        %v3070 = vrot.slane %v3069, 2
        %v3071 = vadd.f32 %v3069, %v3070
        %v3072 = vrot.slane %v3071, 1
        %v3073 = vadd.f32 %v3071, %v3072
        %v3074 = vmul.f32 %v2675, %v2675
        %v3075 = vmul.f32 %v2894, %v2894
        %v3076 = vmul.f32 %v2677, %v2677
        %v3077 = vmul.f32 %v2896, %v2896
        %v3078 = vmul.f32 %v2680, %v2680
        %v3079 = vmul.f32 %v2899, %v2899
        %v3080 = vmul.f32 %v2682, %v2682
        %v3081 = vmul.f32 %v2901, %v2901
        %v3082 = vmul.f32 %v2685, %v2685
        %v3083 = vmul.f32 %v2904, %v2904
        %v3084 = vmul.f32 %v2687, %v2687
        %v3085 = vmul.f32 %v2906, %v2906
        %v3086 = vmul.f32 %v2690, %v2690
        %v3087 = vmul.f32 %v2909, %v2909
        %v3088 = vmul.f32 %v2692, %v2692
        %v3089 = vmul.f32 %v2911, %v2911
        %v3090 = vmul.f32 %v2695, %v2695
        %v3091 = vmul.f32 %v2914, %v2914
        %v3092 = vmul.f32 %v2697, %v2697
        %v3093 = vmul.f32 %v2916, %v2916
        %v3094 = vmul.f32 %v2700, %v2700
        %v3095 = vmul.f32 %v2919, %v2919
        %v3096 = vmul.f32 %v2702, %v2702
        %v3097 = vmul.f32 %v2921, %v2921
        %v3098 = vmul.f32 %v2705, %v2705
        %v3099 = vmul.f32 %v2924, %v2924
        %v3100 = vmul.f32 %v2707, %v2707
        %v3101 = vmul.f32 %v2926, %v2926
        %v3102 = vmul.f32 %v2710, %v2710
        %v3103 = vmul.f32 %v2929, %v2929
        %v3104 = vmul.f32 %v2712, %v2712
        %v3105 = vmul.f32 %v2931, %v2931
        %v3106 = vmul.f32 %v2715, %v2715
        %v3107 = vmul.f32 %v2934, %v2934
        %v3108 = vmul.f32 %v2717, %v2717
        %v3109 = vmul.f32 %v2936, %v2936
        %v3110 = vmul.f32 %v2720, %v2720
        %v3111 = vmul.f32 %v2939, %v2939
        %v3112 = vmul.f32 %v2722, %v2722
        %v3113 = vmul.f32 %v2941, %v2941
        %v3114 = vmul.f32 %v2725, %v2725
        %v3115 = vmul.f32 %v2944, %v2944
        %v3116 = vmul.f32 %v2727, %v2727
        %v3117 = vmul.f32 %v2946, %v2946
        %v3118 = vmul.f32 %v2730, %v2730
        %v3119 = vmul.f32 %v2949, %v2949
        %v3120 = vmul.f32 %v2732, %v2732
        %v3121 = vmul.f32 %v2951, %v2951
        %v3122 = vmul.f32 %v2735, %v2735
        %v3123 = vmul.f32 %v2954, %v2954
        %v3124 = vadd.f32 %v3074, %v3076
        %v3125 = vadd.f32 %v3124, %v3078
        %v3126 = vadd.f32 %v3125, %v3080
        %v3127 = vadd.f32 %v3126, %v3082
        %v3128 = vadd.f32 %v3127, %v3084
        %v3129 = vadd.f32 %v3128, %v3086
        %v3130 = vadd.f32 %v3129, %v3088
        %v3131 = vadd.f32 %v3130, %v3090
        %v3132 = vadd.f32 %v3131, %v3092
        %v3133 = vadd.f32 %v3132, %v3094
        %v3134 = vadd.f32 %v3133, %v3096
        %v3135 = vadd.f32 %v3134, %v3098
        %v3136 = vadd.f32 %v3135, %v3100
        %v3137 = vadd.f32 %v3136, %v3102
        %v3138 = vadd.f32 %v3137, %v3104
        %v3139 = vadd.f32 %v3138, %v3106
        %v3140 = vadd.f32 %v3139, %v3108
        %v3141 = vadd.f32 %v3140, %v3110
        %v3142 = vadd.f32 %v3141, %v3112
        %v3143 = vadd.f32 %v3142, %v3114
        %v3144 = vadd.f32 %v3143, %v3116
        %v3145 = vadd.f32 %v3144, %v3118
        %v3146 = vadd.f32 %v3145, %v3120
        %v3147 = vsel %vm1701, %v3122, 0.0
        %v3148 = vadd.f32 %v3146, %v3147
        %v3149 = vrot.slane %v3148, 4
        %v3150 = vadd.f32 %v3148, %v3149
        %v3151 = vrot.slane %v3150, 2
        %v3152 = vadd.f32 %v3150, %v3151
        %v3153 = vrot.slane %v3152, 1
        %v3154 = vadd.f32 %v3152, %v3153
        %v3155 = vadd.f32 %v3075, %v3077
        %v3156 = vadd.f32 %v3155, %v3079
        %v3157 = vadd.f32 %v3156, %v3081
        %v3158 = vadd.f32 %v3157, %v3083
        %v3159 = vadd.f32 %v3158, %v3085
        %v3160 = vadd.f32 %v3159, %v3087
        %v3161 = vadd.f32 %v3160, %v3089
        %v3162 = vadd.f32 %v3161, %v3091
        %v3163 = vadd.f32 %v3162, %v3093
        %v3164 = vadd.f32 %v3163, %v3095
        %v3165 = vadd.f32 %v3164, %v3097
        %v3166 = vadd.f32 %v3165, %v3099
        %v3167 = vadd.f32 %v3166, %v3101
        %v3168 = vadd.f32 %v3167, %v3103
        %v3169 = vadd.f32 %v3168, %v3105
        %v3170 = vadd.f32 %v3169, %v3107
        %v3171 = vadd.f32 %v3170, %v3109
        %v3172 = vadd.f32 %v3171, %v3111
        %v3173 = vadd.f32 %v3172, %v3113
        %v3174 = vadd.f32 %v3173, %v3115
        %v3175 = vadd.f32 %v3174, %v3117
        %v3176 = vadd.f32 %v3175, %v3119
        %v3177 = vadd.f32 %v3176, %v3121
        %v3178 = vsel %vm1701, %v3123, 0.0
        %v3179 = vadd.f32 %v3177, %v3178
        %v3180 = vrot.slane %v3179, 4
        %v3181 = vadd.f32 %v3179, %v3180
        %v3182 = vrot.slane %v3181, 2
        %v3183 = vadd.f32 %v3181, %v3182
        %v3184 = vrot.slane %v3183, 1
        %v3185 = vadd.f32 %v3183, %v3184
        %vm3186 = vcmask 1040384
        %v3187 = vsel %vm3186, %v3042, %v3154
        %v3188 = vsel %vm3186, %v3073, %v3185
        %v3189 = vld [vmem:[#allocation7] sm:$0xf]
        %v3192 = vrot.slane %v3188, 6
        %v3193 = vsel %vm1699, %v3187, %v3192
        %v3195 = vadd.f32 %v3189, %v3193
        %3196 = vst [vmem:[#allocation7] sm:$0xf] %v3195
        %p3197 = scmp.lt.s32.totalorder %s29, 3
        %s3198 = scalar_select %p3197, %s29, 3
        %s3199 = smul.addr %s3198, 50
        %s3200 = smul.addr %s3199, 8
        %s3201 = scalar_lea.vmem %s4, %s3200
        // Predicated region
        $region41: #{tpu_custom_call.1} parent=31 // pred_check
          %p3202 = pneg %p122
        $region42: #{tpu_custom_call.1} parent=31 // pred_check_branch
          %3204 = sbr.rel (%p3202) target = $region44
        $region43: #{tpu_custom_call.1} parent=31 // pred_region
          _
        $region44: #{tpu_custom_call.1} parent=31 // pred_fallthru
          _
        // Predicated region
        $region45: #{tpu_custom_call.1} parent=31 // pred_check
          %p3205 = pneg %p143
        $region46: #{tpu_custom_call.1} parent=31 // pred_check_branch
          %3207 = sbr.rel (%p3205) target = $region48
        $region47: #{tpu_custom_call.1} parent=31 // pred_region
          %3209 = vsyncadd [#allocation6], 0
          %s3211 = sshll.u32 [#allocation7], 4
          %s3212 = int_to_ptr.vmem [resolvable:$true] %s3211
          %s3213 = sshll.u32 %s5, 4
          %s3214 = int_to_ptr.hbm [resolvable:$true] %s3213
          %3216 = dma.vmem_to_hbm [thread:$0]  %s3212, 64, %s3214, [#allocation6]
        $region48: #{tpu_custom_call.1} parent=31 // pred_fallthru
          _
        // Predicated region
        $region49: #{tpu_custom_call.1} parent=31 // pred_check
          %p3217 = pneg %p143
        $region50: #{tpu_custom_call.1} parent=31 // pred_check_branch
          %3219 = sbr.rel (%p3217) target = $region52
        $region51: #{tpu_custom_call.1} parent=31 // pred_region
          %3221 = dma.done [#allocation6], 64
        $region52: #{tpu_custom_call.1} parent=31 // pred_fallthru
          _
      $region32: #{tpu_custom_call.1} parent=5 // pred_fallthru
        _
      %p3222 = scmp.le.s32.totalorder 2, %s24
      // Predicated region
      $region53: #{tpu_custom_call.1} parent=5 // pred_check
        %p3223 = pneg %p3222
      $region54: #{tpu_custom_call.1} parent=5 // pred_check_branch
        %3225 = sbr.rel (%p3223) target = $region56
      $region55: #{tpu_custom_call.1} parent=5 // pred_region
        %s3226 = ssub.s32 %s24, 2
        // Predicated region
        $region57: #{tpu_custom_call.1} parent=55 // pred_check
          %p3227 = pneg %p128
        $region58: #{tpu_custom_call.1} parent=55 // pred_check_branch
          %3229 = sbr.rel (%p3227) target = $region60
        $region59: #{tpu_custom_call.1} parent=55 // pred_region
          %p3230 = scmp.lt.s32.totalorder %s30, 3
          %s3231 = scalar_select %p3230, %s30, 3
          %s3232 = smul.addr %s3231, 50
          %s3233 = smul.addr %s3232, 8
          %s3234 = scalar_lea.vmem %s4, %s3233
        $region60: #{tpu_custom_call.1} parent=55 // pred_fallthru
          _
      $region56: #{tpu_custom_call.1} parent=5 // pred_fallthru
        _
    $region6: #{tpu_custom_call.1} parent=1 // loop_footer
      %s28 = sadd.s32 1, %s24
    $region7: #{tpu_custom_call.1} parent=1 // loop_footer_branch
      %23 = sbr.rel target = $region3
    $region8: #{tpu_custom_call.1} parent=1 // loop_exit
      _
    %3235 = vsyncpa [#allocation5], 1
    %s3236 = scalar_lea.sflag [#allocation5], 1
    %3237 = vsyncpa %s3236, 1
    %3238 = vsyncpa [#allocation6], 1
    %s3239 = scalar_lea.sflag [#allocation6], 1
    %3240 = vsyncpa %s3239, 1

</llo_original>
